<compile_context>
chip_gen: v7x
topology: tpu7x:2x2x1
jax: 0.10.0
libtpu: 0.0.40
codegen_flags: <defaults>
</compile_context>

<pallas_src>
import jax
import jax.numpy as jnp
from jax import lax
from jax.experimental import pallas as pl
from jax.experimental.pallas import tpu as pltpu


_LANE_CHUNK = 128  # W is processed in lane chunks of this width.


def _spread_matrix(wc):
    """(2*wc, 2*wc) matrix P with P[j, 2j] = P[wc + j, 2j + 1] = 0.5, else 0.

    [p_even | p_odd] @ P lane-interleaves the two halves (even/odd output
    columns) and applies the IWT's /2 scaling inside the same exact multiply.
    """
    rows = lax.broadcasted_iota(jnp.int32, (2 * wc, 2 * wc), 0)
    cols = lax.broadcasted_iota(jnp.int32, (2 * wc, 2 * wc), 1)
    even = jnp.logical_and(rows < wc, cols == 2 * rows)
    odd = jnp.logical_and(rows >= wc, cols == 2 * rows - 2 * wc + 1)
    return jnp.where(jnp.logical_or(even, odd), 0.5, 0.0).astype(jnp.float32)


def _iwt_kernel(ll_ref, hl_ref, lh_ref, hh_ref, o_ref):
    """Four (TM, W) sub-band tiles -> one (TM, 4W) interleaved output tile.

    o[i, 0:2W]  = output row 2i   : interleave(p00[i, :], p01[i, :]) over lanes
    o[i, 2W:4W] = output row 2i+1 : interleave(p10[i, :], p11[i, :]) over lanes
    so the wrapper reshape (M, 4W) -> (B, C, 2H, 2W) is a pure bitcast.
    """
    f32 = jnp.float32
    # Cast in-kernel (inputs may be bf16/f16; v5e has no bf16 VALU). The /2 is
    # folded into the permutation matrix, so no per-input scaling here.
    x1 = ll_ref[...].astype(f32)
    x2 = hl_ref[...].astype(f32)
    x3 = lh_ref[...].astype(f32)
    x4 = hh_ref[...].astype(f32)

    # Butterfly: 8 add/sub instead of 12.
    a = x1 - x3
    b = x1 + x3
    c = x2 - x4
    d = x2 + x4
    p00 = a - c   # h[0::2, 0::2] ~ x1 - x2 - x3 + x4   (scaling applied by P)
    p01 = a + c   # h[0::2, 1::2] ~ x1 + x2 - x3 - x4
    p10 = b - d   # h[1::2, 0::2] ~ x1 - x2 + x3 - x4
    p11 = b + d   # h[1::2, 1::2] ~ x1 + x2 + x3 + x4

    tm, w = p00.shape
    chunk = min(w, _LANE_CHUNK)
    n_full = w // chunk
    tail = w - n_full * chunk

    # Hoisted constants: one full-chunk matrix + (at most) one tail matrix.
    p_full = _spread_matrix(chunk)
    p_tail = _spread_matrix(tail) if tail else None

    hi = jax.lax.Precision.HIGHEST  # keep the f32 data exact through the MXU

    for ci in range(n_full + (1 if tail else 0)):
        s = ci * chunk
        wc = chunk if ci < n_full else tail
        perm = p_full if ci < n_full else p_tail
        sl = slice(s, s + wc)

        # One fused dot per output row group: concat along lanes then permute.
        q_e = jnp.concatenate([p00[:, sl], p01[:, sl]], axis=-1)   # (TM, 2wc)
        q_o = jnp.concatenate([p10[:, sl], p11[:, sl]], axis=-1)
        row_e = jnp.dot(q_e, perm, preferred_element_type=f32, precision=hi)
        row_o = jnp.dot(q_o, perm, preferred_element_type=f32, precision=hi)

        o_ref[:, 2 * s:2 * s + 2 * wc] = row_e                       # h rows 2i
        o_ref[:, 2 * w + 2 * s:2 * w + 2 * s + 2 * wc] = row_o       # h rows 2i+1


def _chip_plan():
    """(target elements per sub-band tile, vmem_limit_bytes), generation-aware."""
    try:
        kind = jax.devices()[0].device_kind.lower()
    except Exception:
        kind = ""
    if "v2" in kind or "v3" in kind:
        plan = (32 * 1024, 12 * 1024 * 1024)
    elif "v7" in kind or "7x" in kind:
        # v7x: only 64 MiB VMEM per TensorCore -> smaller tiles & cap the limit.
        plan = (128 * 1024, 40 * 1024 * 1024)
    else:
        # v4 / v5e / v5p / v6e: 128 MiB physical VMEM; the v5e *scoped* default
        # is only 16 MiB, hence the explicit limit.
        plan = (256 * 1024, 64 * 1024 * 1024)
    target_elems, vmem_limit = plan
    try:  # refine the cap from the actual hardware when the query is available
        phys = pltpu.get_tpu_info().vmem_capacity_bytes
        vmem_limit = max(16 * 1024 * 1024, min(vmem_limit, (phys * 3) // 4))
    except Exception:
        pass
    return target_elems, vmem_limit


def _pick_row_block(m, w, target_elems, dtype):
    """Rows per grid step: ~target_elems per sub-band tile, sublane-aligned."""
    sub = 16 if jnp.dtype(dtype).itemsize < 4 else 8  # bf16/f16 pack 16 rows
    target_rows = max(sub, target_elems // max(w, 1))
    if m <= target_rows:
        return m                      # full-dim block (always legal)
    # Prefer an aligned divisor of m so every block is full.
    cand = (target_rows // sub) * sub
    while cand >= sub:
        if m % cand == 0:
            return cand
        cand -= sub
    # Fall back to an aligned non-divisor block; Pallas masks the ragged edge.
    return min(m, max(sub, (target_rows // sub) * sub))


def winv_iwt(x_ll, x_hl, x_lh, x_hh):
    """Pallas TPU IWT: iwt_init(cat([LL, HL, LH, HH], dim=1)).

    Inputs : four (B, C, H, W) sub-bands (any float dtype, consumed in place).
    Output : (B, C, 2H, 2W) float32 (matches the PyTorch module's .float()).
    """
    B, C, H, W = x_ll.shape
    for t in (x_hl, x_lh, x_hh):
        assert t.shape == (B, C, H, W), (t.shape, x_ll.shape)

    M = B * C * H                      # every input row is independent
    target_elems, vmem_limit = _chip_plan()
    TM = _pick_row_block(M, W, target_elems, x_ll.dtype)
    grid = (pl.cdiv(M, TM),)

    flat = lambda x: x.reshape(M, W)   # pure row-major collapse (no copy)
    in_spec = pl.BlockSpec((TM, W), lambda i: (i, 0))
    out_spec = pl.BlockSpec((TM, 4 * W), lambda i: (i, 0))

    out2d = pl.pallas_call(
        _iwt_kernel,
        out_shape=jax.ShapeDtypeStruct((M, 4 * W), jnp.float32),
        grid=grid,
        in_specs=[in_spec, in_spec, in_spec, in_spec],
        out_specs=out_spec,
        compiler_params=pltpu.CompilerParams(
            dimension_semantics=("parallel",),
            vmem_limit_bytes=vmem_limit),
    )(flat(x_ll), flat(x_hl), flat(x_lh), flat(x_hh))

    # (M, 4W) == (B, C, H, 2, 2W) row-major == (B, C, 2H, 2W): pure bitcast.
    return out2d.reshape(B, C, 2 * H, 2 * W)


def _reference_iwt(x_ll, x_hl, x_lh, x_hh):
    """Pure-JAX reference of iwt_init(cat([LL, HL, LH, HH], 1)) for validation."""
    B, C, H, W = x_ll.shape
    x1 = x_ll.astype(jnp.float32) / 2
    x2 = x_hl.astype(jnp.float32) / 2
    x3 = x_lh.astype(jnp.float32) / 2
    x4 = x_hh.astype(jnp.float32) / 2
    h = jnp.zeros((B, C, 2 * H, 2 * W), jnp.float32)
    h = h.at[:, :, 0::2, 0::2].set(x1 - x2 - x3 + x4)
    h = h.at[:, :, 1::2, 0::2].set(x1 - x2 + x3 - x4)
    h = h.at[:, :, 0::2, 1::2].set(x1 + x2 - x3 - x4)
    h = h.at[:, :, 1::2, 1::2].set(x1 + x2 + x3 + x4)
    return h


def _check(key, shape):
    kll, khl, klh, khh = jax.random.split(key, 4)
    x_ll = jax.random.normal(kll, shape, dtype=jnp.float32)
    x_hl = jax.random.normal(khl, shape, dtype=jnp.float32)
    x_lh = jax.random.normal(klh, shape, dtype=jnp.float32)
    x_hh = jax.random.normal(khh, shape, dtype=jnp.float32)

    out = jax.block_until_ready(jax.jit(winv_iwt)(x_ll, x_hl, x_lh, x_hh))
    ref = _reference_iwt(x_ll, x_hl, x_lh, x_hh)

    B, C, H, W = shape
    assert out.shape == (B, C, 2 * H, 2 * W), out.shape
    assert out.dtype == jnp.float32, out.dtype
    # Exact with the 6-pass f32 MXU algorithm; tolerance leaves headroom if
    # HIGHEST maps to the 3-pass algorithm on some generation.
    assert jnp.allclose(out, ref, atol=1e-4, rtol=1e-4), "mismatch vs reference"


if __name__ == "__main__":
    key = jax.random.PRNGKey(0)
    k0, k1 = jax.random.split(key, 2)

    # Main case consistent with the module (channels=4, half-resolution 16x16).
    _check(k0, (2, 4, 16, 16))
    # Exercise the non-multiple-of-128 width path (full chunk + lane tail).
    _check(k1, (1, 4, 8, 144))

    print("KERNEL_OK")
</pallas_src>

<mosaic_0001>
module attributes {stable_mosaic.version = 11 : i64} {
  func.func @_iwt_kernel(%arg0: i32, %arg1: memref<128x16xf32, #tpu.memory_space<vmem>>, %arg2: memref<128x16xf32, #tpu.memory_space<vmem>>, %arg3: memref<128x16xf32, #tpu.memory_space<vmem>>, %arg4: memref<128x16xf32, #tpu.memory_space<vmem>>, %arg5: memref<128x64xf32, #tpu.memory_space<vmem>>) attributes {dimension_semantics = [#tpu.dimension_semantics<parallel>], iteration_bounds = array<i64: 1>, scalar_prefetch = 0 : i64, scratch_operands = 0 : i64, tpu.core_type = #tpu.core_type<tc>, window_params = [{transform_indices = @transform_0, window_bounds = array<i64: 128, 16>}, {transform_indices = @transform_1, window_bounds = array<i64: 128, 16>}, {transform_indices = @transform_2, window_bounds = array<i64: 128, 16>}, {transform_indices = @transform_3, window_bounds = array<i64: 128, 16>}, {transform_indices = @transform_4, window_bounds = array<i64: 128, 64>}]} {
    %c0 = arith.constant 0 : index
    %c0_0 = arith.constant 0 : index
    %0 = vector.load %arg1[%c0, %c0_0] : memref<128x16xf32, #tpu.memory_space<vmem>>, vector<128x16xf32>
    %c0_1 = arith.constant 0 : index
    %c0_2 = arith.constant 0 : index
    %1 = vector.load %arg2[%c0_1, %c0_2] : memref<128x16xf32, #tpu.memory_space<vmem>>, vector<128x16xf32>
    %c0_3 = arith.constant 0 : index
    %c0_4 = arith.constant 0 : index
    %2 = vector.load %arg3[%c0_3, %c0_4] : memref<128x16xf32, #tpu.memory_space<vmem>>, vector<128x16xf32>
    %c0_5 = arith.constant 0 : index
    %c0_6 = arith.constant 0 : index
    %3 = vector.load %arg4[%c0_5, %c0_6] : memref<128x16xf32, #tpu.memory_space<vmem>>, vector<128x16xf32>
    %4 = arith.subf %0, %2 : vector<128x16xf32>
    %5 = arith.addf %0, %2 : vector<128x16xf32>
    %6 = arith.subf %1, %3 : vector<128x16xf32>
    %7 = arith.addf %1, %3 : vector<128x16xf32>
    %8 = arith.subf %4, %6 : vector<128x16xf32>
    %9 = arith.addf %4, %6 : vector<128x16xf32>
    %10 = arith.subf %5, %7 : vector<128x16xf32>
    %11 = arith.addf %5, %7 : vector<128x16xf32>
    %12 = tpu.iota {dimensions = array<i32: 0>} : vector<32x32xi32>
    %13 = tpu.iota {dimensions = array<i32: 1>} : vector<32x32xi32>
    %c16_i32 = arith.constant 16 : i32
    %14 = vector.broadcast %c16_i32 : i32 to vector<32x32xi32>
    %15 = arith.cmpi slt, %12, %14 : vector<32x32xi32>
    %c2_i32 = arith.constant 2 : i32
    %16 = vector.broadcast %c2_i32 : i32 to vector<32x32xi32>
    %17 = arith.muli %16, %12 : vector<32x32xi32>
    %18 = arith.cmpi eq, %13, %17 : vector<32x32xi32>
    %19 = arith.andi %15, %18 : vector<32x32xi1>
    %c16_i32_7 = arith.constant 16 : i32
    %20 = vector.broadcast %c16_i32_7 : i32 to vector<32x32xi32>
    %21 = arith.cmpi sge, %12, %20 : vector<32x32xi32>
    %c2_i32_8 = arith.constant 2 : i32
    %22 = vector.broadcast %c2_i32_8 : i32 to vector<32x32xi32>
    %23 = arith.muli %22, %12 : vector<32x32xi32>
    %c32_i32 = arith.constant 32 : i32
    %24 = vector.broadcast %c32_i32 : i32 to vector<32x32xi32>
    %25 = arith.subi %23, %24 : vector<32x32xi32>
    %c1_i32 = arith.constant 1 : i32
    %26 = vector.broadcast %c1_i32 : i32 to vector<32x32xi32>
    %27 = arith.addi %25, %26 : vector<32x32xi32>
    %28 = arith.cmpi eq, %13, %27 : vector<32x32xi32>
    %29 = arith.andi %21, %28 : vector<32x32xi1>
    %30 = arith.ori %19, %29 : vector<32x32xi1>
    %cst = arith.constant 5.000000e-01 : f32
    %cst_9 = arith.constant 0.000000e+00 : f32
    %31 = vector.broadcast %cst : f32 to vector<32x32xf32>
    %32 = vector.broadcast %cst_9 : f32 to vector<32x32xf32>
    %33 = arith.select %30, %31, %32 : vector<32x32xi1>, vector<32x32xf32>
    %34 = tpu.concatenate %8, %9 in 1 : vector<128x16xf32>, vector<128x16xf32> -> vector<128x32xf32>
    %35 = tpu.concatenate %10, %11 in 1 : vector<128x16xf32>, vector<128x16xf32> -> vector<128x32xf32>
    %cst_10 = arith.constant dense<0.000000e+00> : vector<128x32xf32>
    %36 = tpu.matmul %34, %33, %cst_10 {dimension_numbers = #tpu.dot_dimension_numbers<[1], [0], [0], [1], [0, 0, 1, 1], [], []>, precision = #tpu.contract_precision<fp32>} : vector<128x32xf32>, vector<32x32xf32>, vector<128x32xf32> -> vector<128x32xf32>
    %cst_11 = arith.constant dense<0.000000e+00> : vector<128x32xf32>
    %37 = tpu.matmul %35, %33, %cst_11 {dimension_numbers = #tpu.dot_dimension_numbers<[1], [0], [0], [1], [0, 0, 1, 1], [], []>, precision = #tpu.contract_precision<fp32>} : vector<128x32xf32>, vector<32x32xf32>, vector<128x32xf32> -> vector<128x32xf32>
    %c0_12 = arith.constant 0 : index
    %c0_13 = arith.constant 0 : index
    %38 = vector.load %arg5[%c0_12, %c0_13] : memref<128x64xf32, #tpu.memory_space<vmem>>, vector<128x32xf32>
    tpu.vector_store %arg5[%c0_12, %c0_13], %36 {strides = array<i32>} : memref<128x64xf32, #tpu.memory_space<vmem>>, vector<128x32xf32>,
    %c0_14 = arith.constant 0 : index
    %c32 = arith.constant 32 : index
    %39 = vector.load %arg5[%c0_14, %c32] : memref<128x64xf32, #tpu.memory_space<vmem>>, vector<128x32xf32>
    tpu.vector_store %arg5[%c0_14, %c32], %37 {strides = array<i32>} : memref<128x64xf32, #tpu.memory_space<vmem>>, vector<128x32xf32>,
    return
  }
  func.func @transform_0(%arg0: i32) -> (i32, i32) {
    %c0_i32 = arith.constant 0 : i32
    %c0_i32_0 = arith.constant 0 : i32
    return %arg0, %c0_i32 : i32, i32
  }
  func.func @transform_1(%arg0: i32) -> (i32, i32) {
    %c0_i32 = arith.constant 0 : i32
    %c0_i32_0 = arith.constant 0 : i32
    return %arg0, %c0_i32 : i32, i32
  }
  func.func @transform_2(%arg0: i32) -> (i32, i32) {
    %c0_i32 = arith.constant 0 : i32
    %c0_i32_0 = arith.constant 0 : i32
    return %arg0, %c0_i32 : i32, i32
  }
  func.func @transform_3(%arg0: i32) -> (i32, i32) {
    %c0_i32 = arith.constant 0 : i32
    %c0_i32_0 = arith.constant 0 : i32
    return %arg0, %c0_i32 : i32, i32
  }
  func.func @transform_4(%arg0: i32) -> (i32, i32) {
    %c0_i32 = arith.constant 0 : i32
    %c0_i32_0 = arith.constant 0 : i32
    return %arg0, %c0_i32 : i32, i32
  }
}

</mosaic_0001>

<llo_original>
// kernel: winv_iwt.1
$region0: #{winv_iwt.1}
  #allocation0 [shape = 'u32[]', space=smem, size = 0x4, offset = 0x4, fixed_abs, tag = 'smem constant byte address 0x4 - core index']
  #allocation1 [shape = 'u32[144,128]{1,0:T(1,128)}', space=vmem, size = 0x12000, scoped, tag = 'internal scratch']
  %s0 = inlined_call_operand.hbm [shape: f32[128,16], index: 0, kind: input, shape index: {}]
  %s1 = inlined_call_operand.hbm [shape: f32[128,16], index: 1, kind: input, shape index: {}]
  %s2 = inlined_call_operand.hbm [shape: f32[128,16], index: 2, kind: input, shape index: {}]
  %s3 = inlined_call_operand.hbm [shape: f32[128,16], index: 3, kind: input, shape index: {}]
  %s4 = inlined_call_operand.hbm [shape: f32[128,64], index: 4, kind: output, shape index: {}]
  %s5 = sld [smem:[#allocation0]]
  $region42: #{winv_iwt.1} parent=0
    _
  %s7 = ssub.s32 1, %s5
  %s8 = scalar_select 0, %s7, %s5
  $region1: #{winv_iwt.1} parent=0
    #allocation2 [shape = 'u8[65536]{0}', space=vmem, size = 0x10000, scoped, tag = 'input window, operand 0, single buffered']
    #allocation3 [shape = 's32[1]{0}', space=sflag, size = 0x4, scoped, tag = 'scoped memory for winv_iwt.1']
    #allocation4 [shape = 's32[1]{0}', space=sflag, size = 0x4, scoped, tag = 'scoped memory for winv_iwt.1']
    #allocation5 [shape = 'u8[65536]{0}', space=vmem, size = 0x10000, scoped, tag = 'input window, operand 1, single buffered']
    #allocation6 [shape = 's32[1]{0}', space=sflag, size = 0x4, scoped, tag = 'scoped memory for winv_iwt.1']
    #allocation7 [shape = 'u8[65536]{0}', space=vmem, size = 0x10000, scoped, tag = 'input window, operand 2, single buffered']
    #allocation8 [shape = 'u8[65536]{0}', space=vmem, size = 0x10000, scoped, tag = 'input window, operand 3, single buffered']
    #allocation9 [shape = 's32[1]{0}', space=sflag, size = 0x4, scoped, tag = 'scoped memory for winv_iwt.1']
    #allocation10 [shape = 'u8[65536]{0}', space=vmem, size = 0x10000, scoped, tag = 'output window, operand 0, single buffered']
    %9 = vsyncpa [#allocation3], 0
    %10 = vsyncpa [#allocation6], 0
    %11 = vsyncpa [#allocation9], 0
    %12 = vsyncpa [#allocation4], 0
    // Predicated region
    $region2: #{winv_iwt.1} parent=1 // pred_check
      _
    $region3: #{winv_iwt.1} parent=1 // pred_check_branch
      %14 = sbr.rel (0) target = $region5
    $region4: #{winv_iwt.1} parent=1 // pred_region
      %s16 = ssub.s32 2048, 2048
      %17 = vsyncadd [#allocation3], %s16
      %s18 = sshll.u32 [#allocation2], 4
      %s19 = int_to_ptr.vmem [resolvable:$true] %s18
      %24 = dma.hbm_to_vmem [thread:$0]  %s0, 2048, %s19, [#allocation3], 128, 128, 8
    $region5: #{winv_iwt.1} parent=1 // pred_fallthru
      _
    // Predicated region
    $region6: #{winv_iwt.1} parent=1 // pred_check
      _
    $region7: #{winv_iwt.1} parent=1 // pred_check_branch
      %26 = sbr.rel (0) target = $region9
    $region8: #{winv_iwt.1} parent=1 // pred_region
      %s28 = ssub.s32 2048, 2048
      %29 = vsyncadd [#allocation6], %s28
      %s30 = sshll.u32 [#allocation5], 4
      %s31 = int_to_ptr.vmem [resolvable:$true] %s30
      %36 = dma.hbm_to_vmem [thread:$0]  %s1, 2048, %s31, [#allocation6], 128, 128, 8
    $region9: #{winv_iwt.1} parent=1 // pred_fallthru
      _
    // Predicated region
    $region10: #{winv_iwt.1} parent=1 // pred_check
      _
    $region11: #{winv_iwt.1} parent=1 // pred_check_branch
      %38 = sbr.rel (0) target = $region13
    $region12: #{winv_iwt.1} parent=1 // pred_region
      %s40 = ssub.s32 2048, 2048
      %41 = vsyncadd [#allocation6], %s40
      %s42 = sshll.u32 [#allocation7], 4
      %s43 = int_to_ptr.vmem [resolvable:$true] %s42
      %48 = dma.hbm_to_vmem [thread:$0]  %s2, 2048, %s43, [#allocation6], 128, 128, 8
    $region13: #{winv_iwt.1} parent=1 // pred_fallthru
      _
    // Predicated region
    $region14: #{winv_iwt.1} parent=1 // pred_check
      _
    $region15: #{winv_iwt.1} parent=1 // pred_check_branch
      %50 = sbr.rel (0) target = $region17
    $region16: #{winv_iwt.1} parent=1 // pred_region
      %s52 = ssub.s32 2048, 2048
      %53 = vsyncadd [#allocation9], %s52
      %s54 = sshll.u32 [#allocation8], 4
      %s55 = int_to_ptr.vmem [resolvable:$true] %s54
      %60 = dma.hbm_to_vmem [thread:$0]  %s3, 2048, %s55, [#allocation9], 128, 128, 8
    $region17: #{winv_iwt.1} parent=1 // pred_fallthru
      _
    // Predicated region
    $region18: #{winv_iwt.1} parent=1 // pred_check
      _
    $region19: #{winv_iwt.1} parent=1 // pred_check_branch
      %62 = sbr.rel (0) target = $region21
    $region20: #{winv_iwt.1} parent=1 // pred_region
      %63 = dma.done [#allocation3], 2048
    $region21: #{winv_iwt.1} parent=1 // pred_fallthru
      _
    // Predicated region
    $region22: #{winv_iwt.1} parent=1 // pred_check
      _
    $region23: #{winv_iwt.1} parent=1 // pred_check_branch
      %65 = sbr.rel (0) target = $region25
    $region24: #{winv_iwt.1} parent=1 // pred_region
      %66 = dma.done [#allocation6], 2048
    $region25: #{winv_iwt.1} parent=1 // pred_fallthru
      _
    // Predicated region
    $region26: #{winv_iwt.1} parent=1 // pred_check
      _
    $region27: #{winv_iwt.1} parent=1 // pred_check_branch
      %68 = sbr.rel (0) target = $region29
    $region28: #{winv_iwt.1} parent=1 // pred_region
      %69 = dma.done [#allocation6], 2048
    $region29: #{winv_iwt.1} parent=1 // pred_fallthru
      _
    // Predicated region
    $region30: #{winv_iwt.1} parent=1 // pred_check
      _
    $region31: #{winv_iwt.1} parent=1 // pred_check_branch
      %71 = sbr.rel (0) target = $region33
    $region32: #{winv_iwt.1} parent=1 // pred_region
      %72 = dma.done [#allocation9], 2048
    $region33: #{winv_iwt.1} parent=1 // pred_fallthru
      _
    %v73 = vld [vmem:[#allocation2] sm:$0xff]
    %v74 = vld [vmem:[#allocation2 + $0x8] sm:$0xff]
    %v75 = vld [vmem:[#allocation2 + $0x10] sm:$0xff]
    %v76 = vld [vmem:[#allocation2 + $0x18] sm:$0xff]
    %v77 = vld [vmem:[#allocation2 + $0x20] sm:$0xff]
    %v78 = vld [vmem:[#allocation2 + $0x28] sm:$0xff]
    %v79 = vld [vmem:[#allocation2 + $0x30] sm:$0xff]
    %v80 = vld [vmem:[#allocation2 + $0x38] sm:$0xff]
    %v81 = vld [vmem:[#allocation2 + $0x40] sm:$0xff]
    %v82 = vld [vmem:[#allocation2 + $0x48] sm:$0xff]
    %v83 = vld [vmem:[#allocation2 + $0x50] sm:$0xff]
    %v84 = vld [vmem:[#allocation2 + $0x58] sm:$0xff]
    %v85 = vld [vmem:[#allocation2 + $0x60] sm:$0xff]
    %v86 = vld [vmem:[#allocation2 + $0x68] sm:$0xff]
    %v87 = vld [vmem:[#allocation2 + $0x70] sm:$0xff]
    %v88 = vld [vmem:[#allocation2 + $0x78] sm:$0xff]
    %v89 = vld [vmem:[#allocation5] sm:$0xff]
    %v90 = vld [vmem:[#allocation5 + $0x8] sm:$0xff]
    %v91 = vld [vmem:[#allocation5 + $0x10] sm:$0xff]
    %v92 = vld [vmem:[#allocation5 + $0x18] sm:$0xff]
    %v93 = vld [vmem:[#allocation5 + $0x20] sm:$0xff]
    %v94 = vld [vmem:[#allocation5 + $0x28] sm:$0xff]
    %v95 = vld [vmem:[#allocation5 + $0x30] sm:$0xff]
    %v96 = vld [vmem:[#allocation5 + $0x38] sm:$0xff]
    %v97 = vld [vmem:[#allocation5 + $0x40] sm:$0xff]
    %v98 = vld [vmem:[#allocation5 + $0x48] sm:$0xff]
    %v99 = vld [vmem:[#allocation5 + $0x50] sm:$0xff]
    %v100 = vld [vmem:[#allocation5 + $0x58] sm:$0xff]
    %v101 = vld [vmem:[#allocation5 + $0x60] sm:$0xff]
    %v102 = vld [vmem:[#allocation5 + $0x68] sm:$0xff]
    %v103 = vld [vmem:[#allocation5 + $0x70] sm:$0xff]
    %v104 = vld [vmem:[#allocation5 + $0x78] sm:$0xff]
    %v105 = vld [vmem:[#allocation7] sm:$0xff]
    %v106 = vld [vmem:[#allocation7 + $0x8] sm:$0xff]
    %v107 = vld [vmem:[#allocation7 + $0x10] sm:$0xff]
    %v108 = vld [vmem:[#allocation7 + $0x18] sm:$0xff]
    %v109 = vld [vmem:[#allocation7 + $0x20] sm:$0xff]
    %v110 = vld [vmem:[#allocation7 + $0x28] sm:$0xff]
    %v111 = vld [vmem:[#allocation7 + $0x30] sm:$0xff]
    %v112 = vld [vmem:[#allocation7 + $0x38] sm:$0xff]
    %v113 = vld [vmem:[#allocation7 + $0x40] sm:$0xff]
    %v114 = vld [vmem:[#allocation7 + $0x48] sm:$0xff]
    %v115 = vld [vmem:[#allocation7 + $0x50] sm:$0xff]
    %v116 = vld [vmem:[#allocation7 + $0x58] sm:$0xff]
    %v117 = vld [vmem:[#allocation7 + $0x60] sm:$0xff]
    %v118 = vld [vmem:[#allocation7 + $0x68] sm:$0xff]
    %v119 = vld [vmem:[#allocation7 + $0x70] sm:$0xff]
    %v120 = vld [vmem:[#allocation7 + $0x78] sm:$0xff]
    %v121 = vld [vmem:[#allocation8] sm:$0xff]
    %v122 = vld [vmem:[#allocation8 + $0x8] sm:$0xff]
    %v123 = vld [vmem:[#allocation8 + $0x10] sm:$0xff]
    %v124 = vld [vmem:[#allocation8 + $0x18] sm:$0xff]
    %v125 = vld [vmem:[#allocation8 + $0x20] sm:$0xff]
    %v126 = vld [vmem:[#allocation8 + $0x28] sm:$0xff]
    %v127 = vld [vmem:[#allocation8 + $0x30] sm:$0xff]
    %v128 = vld [vmem:[#allocation8 + $0x38] sm:$0xff]
    %v129 = vld [vmem:[#allocation8 + $0x40] sm:$0xff]
    %v130 = vld [vmem:[#allocation8 + $0x48] sm:$0xff]
    %v131 = vld [vmem:[#allocation8 + $0x50] sm:$0xff]
    %v132 = vld [vmem:[#allocation8 + $0x58] sm:$0xff]
    %v133 = vld [vmem:[#allocation8 + $0x60] sm:$0xff]
    %v134 = vld [vmem:[#allocation8 + $0x68] sm:$0xff]
    %v135 = vld [vmem:[#allocation8 + $0x70] sm:$0xff]
    %v136 = vld [vmem:[#allocation8 + $0x78] sm:$0xff]
    %v137 = vsub.f32 %v73, %v105
    %v138 = vsub.f32 %v74, %v106
    %v139 = vsub.f32 %v75, %v107
    %v140 = vsub.f32 %v76, %v108
    %v141 = vsub.f32 %v77, %v109
    %v142 = vsub.f32 %v78, %v110
    %v143 = vsub.f32 %v79, %v111
    %v144 = vsub.f32 %v80, %v112
    %v145 = vsub.f32 %v81, %v113
    %v146 = vsub.f32 %v82, %v114
    %v147 = vsub.f32 %v83, %v115
    %v148 = vsub.f32 %v84, %v116
    %v149 = vsub.f32 %v85, %v117
    %v150 = vsub.f32 %v86, %v118
    %v151 = vsub.f32 %v87, %v119
    %v152 = vsub.f32 %v88, %v120
    %v153 = vadd.f32 %v73, %v105
    %v154 = vadd.f32 %v74, %v106
    %v155 = vadd.f32 %v75, %v107
    %v156 = vadd.f32 %v76, %v108
    %v157 = vadd.f32 %v77, %v109
    %v158 = vadd.f32 %v78, %v110
    %v159 = vadd.f32 %v79, %v111
    %v160 = vadd.f32 %v80, %v112
    %v161 = vadd.f32 %v81, %v113
    %v162 = vadd.f32 %v82, %v114
    %v163 = vadd.f32 %v83, %v115
    %v164 = vadd.f32 %v84, %v116
    %v165 = vadd.f32 %v85, %v117
    %v166 = vadd.f32 %v86, %v118
    %v167 = vadd.f32 %v87, %v119
    %v168 = vadd.f32 %v88, %v120
    %v169 = vsub.f32 %v89, %v121
    %v170 = vsub.f32 %v90, %v122
    %v171 = vsub.f32 %v91, %v123
    %v172 = vsub.f32 %v92, %v124
    %v173 = vsub.f32 %v93, %v125
    %v174 = vsub.f32 %v94, %v126
    %v175 = vsub.f32 %v95, %v127
    %v176 = vsub.f32 %v96, %v128
    %v177 = vsub.f32 %v97, %v129
    %v178 = vsub.f32 %v98, %v130
    %v179 = vsub.f32 %v99, %v131
    %v180 = vsub.f32 %v100, %v132
    %v181 = vsub.f32 %v101, %v133
    %v182 = vsub.f32 %v102, %v134
    %v183 = vsub.f32 %v103, %v135
    %v184 = vsub.f32 %v104, %v136
    %v185 = vadd.f32 %v89, %v121
    %v186 = vadd.f32 %v90, %v122
    %v187 = vadd.f32 %v91, %v123
    %v188 = vadd.f32 %v92, %v124
    %v189 = vadd.f32 %v93, %v125
    %v190 = vadd.f32 %v94, %v126
    %v191 = vadd.f32 %v95, %v127
    %v192 = vadd.f32 %v96, %v128
    %v193 = vadd.f32 %v97, %v129
    %v194 = vadd.f32 %v98, %v130
    %v195 = vadd.f32 %v99, %v131
    %v196 = vadd.f32 %v100, %v132
    %v197 = vadd.f32 %v101, %v133
    %v198 = vadd.f32 %v102, %v134
    %v199 = vadd.f32 %v103, %v135
    %v200 = vadd.f32 %v104, %v136
    %v201 = vsub.f32 %v137, %v169
    %v202 = vsub.f32 %v138, %v170
    %v203 = vsub.f32 %v139, %v171
    %v204 = vsub.f32 %v140, %v172
    %v205 = vsub.f32 %v141, %v173
    %v206 = vsub.f32 %v142, %v174
    %v207 = vsub.f32 %v143, %v175
    %v208 = vsub.f32 %v144, %v176
    %v209 = vsub.f32 %v145, %v177
    %v210 = vsub.f32 %v146, %v178
    %v211 = vsub.f32 %v147, %v179
    %v212 = vsub.f32 %v148, %v180
    %v213 = vsub.f32 %v149, %v181
    %v214 = vsub.f32 %v150, %v182
    %v215 = vsub.f32 %v151, %v183
    %v216 = vsub.f32 %v152, %v184
    %v217 = vadd.f32 %v137, %v169
    %v218 = vadd.f32 %v138, %v170
    %v219 = vadd.f32 %v139, %v171
    %v220 = vadd.f32 %v140, %v172
    %v221 = vadd.f32 %v141, %v173
    %v222 = vadd.f32 %v142, %v174
    %v223 = vadd.f32 %v143, %v175
    %v224 = vadd.f32 %v144, %v176
    %v225 = vadd.f32 %v145, %v177
    %v226 = vadd.f32 %v146, %v178
    %v227 = vadd.f32 %v147, %v179
    %v228 = vadd.f32 %v148, %v180
    %v229 = vadd.f32 %v149, %v181
    %v230 = vadd.f32 %v150, %v182
    %v231 = vadd.f32 %v151, %v183
    %v232 = vadd.f32 %v152, %v184
    %v233 = vsub.f32 %v153, %v185
    %v234 = vsub.f32 %v154, %v186
    %v235 = vsub.f32 %v155, %v187
    %v236 = vsub.f32 %v156, %v188
    %v237 = vsub.f32 %v157, %v189
    %v238 = vsub.f32 %v158, %v190
    %v239 = vsub.f32 %v159, %v191
    %v240 = vsub.f32 %v160, %v192
    %v241 = vsub.f32 %v161, %v193
    %v242 = vsub.f32 %v162, %v194
    %v243 = vsub.f32 %v163, %v195
    %v244 = vsub.f32 %v164, %v196
    %v245 = vsub.f32 %v165, %v197
    %v246 = vsub.f32 %v166, %v198
    %v247 = vsub.f32 %v167, %v199
    %v248 = vsub.f32 %v168, %v200
    %v249 = vadd.f32 %v153, %v185
    %v250 = vadd.f32 %v154, %v186
    %v251 = vadd.f32 %v155, %v187
    %v252 = vadd.f32 %v156, %v188
    %v253 = vadd.f32 %v157, %v189
    %v254 = vadd.f32 %v158, %v190
    %v255 = vadd.f32 %v159, %v191
    %v256 = vadd.f32 %v160, %v192
    %v257 = vadd.f32 %v161, %v193
    %v258 = vadd.f32 %v162, %v194
    %v259 = vadd.f32 %v163, %v195
    %v260 = vadd.f32 %v164, %v196
    %v261 = vadd.f32 %v165, %v197
    %v262 = vadd.f32 %v166, %v198
    %v263 = vadd.f32 %v167, %v199
    %v264 = vadd.f32 %v168, %v200
    %v265 = vlaneseq
    %v266 = vshrl.u32 %v265, 7
    %v267 = vadd.s32 %v266, 8
    %v268 = vadd.s32 %v266, 16
    %v269 = vadd.s32 %v266, 24
    %v270 = vlaneseq
    %v271 = vand.u32 %v270, 127
    %vm272 = vcmp.lt.s32.totalorder %v266, 16
    %vm273 = vcmp.lt.s32.totalorder %v267, 16
    %vm274 = vcmp.lt.s32.totalorder %v268, 16
    %vm275 = vcmp.lt.s32.totalorder %v269, 16
    %v276 = vmul.u32 %v266, 2
    %v277 = vmul.u32 %v267, 2
    %v278 = vmul.u32 %v268, 2
    %v279 = vmul.u32 %v269, 2
    %vm280 = vcmp.eq.s32.totalorder %v271, %v276
    %vm281 = vcmp.eq.s32.totalorder %v271, %v277
    %vm282 = vcmp.eq.s32.totalorder %v271, %v278
    %vm283 = vcmp.eq.s32.totalorder %v271, %v279
    %vm284 = vmand %vm272, %vm280
    %vm285 = vmand %vm273, %vm281
    %vm286 = vmand %vm274, %vm282
    %vm287 = vmand %vm275, %vm283
    %vm288 = vcmp.ge.s32.totalorder %v266, 16
    %vm289 = vcmp.ge.s32.totalorder %v267, 16
    %vm290 = vcmp.ge.s32.totalorder %v268, 16
    %vm291 = vcmp.ge.s32.totalorder %v269, 16
    %v292 = vsub.s32 %v276, 32
    %v293 = vsub.s32 %v277, 32
    %v294 = vsub.s32 %v278, 32
    %v295 = vsub.s32 %v279, 32
    %v296 = vadd.s32 %v292, 1
    %v297 = vadd.s32 %v293, 1
    %v298 = vadd.s32 %v294, 1
    %v299 = vadd.s32 %v295, 1
    %vm300 = vcmp.eq.s32.totalorder %v271, %v296
    %vm301 = vcmp.eq.s32.totalorder %v271, %v297
    %vm302 = vcmp.eq.s32.totalorder %v271, %v298
    %vm303 = vcmp.eq.s32.totalorder %v271, %v299
    %vm304 = vmand %vm288, %vm300
    %vm305 = vmand %vm289, %vm301
    %vm306 = vmand %vm290, %vm302
    %vm307 = vmand %vm291, %vm303
    %vm308 = vmor %vm284, %vm304
    %vm309 = vmor %vm285, %vm305
    %vm310 = vmor %vm286, %vm306
    %vm311 = vmor %vm287, %vm307
    %v312 = vsel %vm308, 0.5, 0.0
    %v313 = vsel %vm309, 0.5, 0.0
    %v314 = vsel %vm310, 0.5, 0.0
    %v315 = vsel %vm311, 0.5, 0.0
    %332 = vrot.lane.b32.xlu0 %v217, 16
    %v333 = vpop.permute.xlu0 %332
    %334 = vrot.lane.b32.xlu0 %v218, 16
    %v335 = vpop.permute.xlu0 %334
    %336 = vrot.lane.b32.xlu0 %v219, 16
    %v337 = vpop.permute.xlu0 %336
    %338 = vrot.lane.b32.xlu0 %v220, 16
    %v339 = vpop.permute.xlu0 %338
    %340 = vrot.lane.b32.xlu0 %v221, 16
    %v341 = vpop.permute.xlu0 %340
    %342 = vrot.lane.b32.xlu0 %v222, 16
    %v343 = vpop.permute.xlu0 %342
    %344 = vrot.lane.b32.xlu0 %v223, 16
    %v345 = vpop.permute.xlu0 %344
    %346 = vrot.lane.b32.xlu0 %v224, 16
    %v347 = vpop.permute.xlu0 %346
    %348 = vrot.lane.b32.xlu0 %v225, 16
    %v349 = vpop.permute.xlu0 %348
    %350 = vrot.lane.b32.xlu0 %v226, 16
    %v351 = vpop.permute.xlu0 %350
    %352 = vrot.lane.b32.xlu0 %v227, 16
    %v353 = vpop.permute.xlu0 %352
    %354 = vrot.lane.b32.xlu0 %v228, 16
    %v355 = vpop.permute.xlu0 %354
    %356 = vrot.lane.b32.xlu0 %v229, 16
    %v357 = vpop.permute.xlu0 %356
    %358 = vrot.lane.b32.xlu0 %v230, 16
    %v359 = vpop.permute.xlu0 %358
    %360 = vrot.lane.b32.xlu0 %v231, 16
    %v361 = vpop.permute.xlu0 %360
    %362 = vrot.lane.b32.xlu0 %v232, 16
    %v363 = vpop.permute.xlu0 %362
    %vm380 = vcmask 130048
    %v381 = vsel %vm380, %v201, %v333
    %v382 = vsel %vm380, %v202, %v335
    %v383 = vsel %vm380, %v203, %v337
    %v384 = vsel %vm380, %v204, %v339
    %v385 = vsel %vm380, %v205, %v341
    %v386 = vsel %vm380, %v206, %v343
    %v387 = vsel %vm380, %v207, %v345
    %v388 = vsel %vm380, %v208, %v347
    %v389 = vsel %vm380, %v209, %v349
    %v390 = vsel %vm380, %v210, %v351
    %v391 = vsel %vm380, %v211, %v353
    %v392 = vsel %vm380, %v212, %v355
    %v393 = vsel %vm380, %v213, %v357
    %v394 = vsel %vm380, %v214, %v359
    %v395 = vsel %vm380, %v215, %v361
    %v396 = vsel %vm380, %v216, %v363
    %413 = vrot.lane.b32.xlu0 %v249, 16
    %v414 = vpop.permute.xlu0 %413
    %415 = vrot.lane.b32.xlu0 %v250, 16
    %v416 = vpop.permute.xlu0 %415
    %417 = vrot.lane.b32.xlu0 %v251, 16
    %v418 = vpop.permute.xlu0 %417
    %419 = vrot.lane.b32.xlu0 %v252, 16
    %v420 = vpop.permute.xlu0 %419
    %421 = vrot.lane.b32.xlu0 %v253, 16
    %v422 = vpop.permute.xlu0 %421
    %423 = vrot.lane.b32.xlu0 %v254, 16
    %v424 = vpop.permute.xlu0 %423
    %425 = vrot.lane.b32.xlu0 %v255, 16
    %v426 = vpop.permute.xlu0 %425
    %427 = vrot.lane.b32.xlu0 %v256, 16
    %v428 = vpop.permute.xlu0 %427
    %429 = vrot.lane.b32.xlu0 %v257, 16
    %v430 = vpop.permute.xlu0 %429
    %431 = vrot.lane.b32.xlu0 %v258, 16
    %v432 = vpop.permute.xlu0 %431
    %433 = vrot.lane.b32.xlu0 %v259, 16
    %v434 = vpop.permute.xlu0 %433
    %435 = vrot.lane.b32.xlu0 %v260, 16
    %v436 = vpop.permute.xlu0 %435
    %437 = vrot.lane.b32.xlu0 %v261, 16
    %v438 = vpop.permute.xlu0 %437
    %439 = vrot.lane.b32.xlu0 %v262, 16
    %v440 = vpop.permute.xlu0 %439
    %441 = vrot.lane.b32.xlu0 %v263, 16
    %v442 = vpop.permute.xlu0 %441
    %443 = vrot.lane.b32.xlu0 %v264, 16
    %v444 = vpop.permute.xlu0 %443
    %v461 = vsel %vm380, %v233, %v414
    %v462 = vsel %vm380, %v234, %v416
    %v463 = vsel %vm380, %v235, %v418
    %v464 = vsel %vm380, %v236, %v420
    %v465 = vsel %vm380, %v237, %v422
    %v466 = vsel %vm380, %v238, %v424
    %v467 = vsel %vm380, %v239, %v426
    %v468 = vsel %vm380, %v240, %v428
    %v469 = vsel %vm380, %v241, %v430
    %v470 = vsel %vm380, %v242, %v432
    %v471 = vsel %vm380, %v243, %v434
    %v472 = vsel %vm380, %v244, %v436
    %v473 = vsel %vm380, %v245, %v438
    %v474 = vsel %vm380, %v246, %v440
    %v475 = vsel %vm380, %v247, %v442
    %v476 = vsel %vm380, %v248, %v444
    %vm477 = vcmask 261120
    %v479 = vsel %vm477, %v381, 0
    %v482 = vsel %vm477, %v382, 0
    %v485 = vsel %vm477, %v383, 0
    %v488 = vsel %vm477, %v384, 0
    %v491 = vsel %vm477, %v385, 0
    %v494 = vsel %vm477, %v386, 0
    %v497 = vsel %vm477, %v387, 0
    %v500 = vsel %vm477, %v388, 0
    %v503 = vsel %vm477, %v389, 0
    %v506 = vsel %vm477, %v390, 0
    %v509 = vsel %vm477, %v391, 0
    %v512 = vsel %vm477, %v392, 0
    %v515 = vsel %vm477, %v393, 0
    %v518 = vsel %vm477, %v394, 0
    %v521 = vsel %vm477, %v395, 0
    %v524 = vsel %vm477, %v396, 0
    %526 = vmatprep.subr.mxu0 0.0
    %527 = vmatpush1.msra.mxu0 %v312
    %528 = vmatprep.subr.mxu0 0.0
    %529 = vmatpush1.msra.mxu0 %v313
    %530 = vmatprep.subr.mxu0 0.0
    %531 = vmatpush1.msra.mxu0 %v314
    %532 = vmatprep.subr.mxu0 0.0
    %533 = vmatpush1.msra.mxu0 %v315
    %534 = vmatprep.subr.mxu0 0.0
    %535 = vmatpush1.msra.mxu0 0.0
    %536 = vmatprep.subr.mxu0 0.0
    %537 = vmatpush1.msra.mxu0 0.0
    %538 = vmatprep.subr.mxu0 0.0
    %539 = vmatpush1.msra.mxu0 0.0
    %540 = vmatprep.subr.mxu0 0.0
    %541 = vmatpush1.msra.mxu0 0.0
    %542 = vmatprep.subr.mxu0 0.0
    %543 = vmatpush1.msra.mxu0 0.0
    %544 = vmatprep.subr.mxu0 0.0
    %545 = vmatpush1.msra.mxu0 0.0
    %546 = vmatprep.subr.mxu0 0.0
    %547 = vmatpush1.msra.mxu0 0.0
    %548 = vmatprep.subr.mxu0 0.0
    %549 = vmatpush1.msra.mxu0 0.0
    %550 = vmatprep.subr.mxu0 0.0
    %551 = vmatpush1.msra.mxu0 0.0
    %552 = vmatprep.subr.mxu0 0.0
    %553 = vmatpush1.msra.mxu0 0.0
    %554 = vmatprep.subr.mxu0 0.0
    %555 = vmatpush1.msra.mxu0 0.0
    %556 = vmatprep.subr.mxu0 0.0
    %557 = vmatpush1.msra.mxu0 0.0
    %558 = vmatprep.subr.mxu0 0.0
    %559 = vmatpush1.msra.mxu0 0.0
    %560 = vmatprep.subr.mxu0 0.0
    %561 = vmatpush1.msra.mxu0 0.0
    %562 = vmatprep.subr.mxu0 0.0
    %563 = vmatpush1.msra.mxu0 0.0
    %564 = vmatprep.subr.mxu0 0.0
    %565 = vmatpush1.msra.mxu0 0.0
    %566 = vmatprep.subr.mxu0 0.0
    %567 = vmatpush1.msra.mxu0 0.0
    %568 = vmatprep.subr.mxu0 0.0
    %569 = vmatpush1.msra.mxu0 0.0
    %570 = vmatprep.subr.mxu0 0.0
    %571 = vmatpush1.msra.mxu0 0.0
    %572 = vmatprep.subr.mxu0 0.0
    %573 = vmatpush1.msra.mxu0 0.0
    %574 = vmatprep.subr.mxu0 0.0
    %575 = vmatpush1.msra.mxu0 0.0
    %576 = vmatprep.subr.mxu0 0.0
    %577 = vmatpush1.msra.mxu0 0.0
    %578 = vmatprep.subr.mxu0 0.0
    %579 = vmatpush1.msra.mxu0 0.0
    %580 = vmatprep.subr.mxu0 0.0
    %581 = vmatpush1.msra.mxu0 0.0
    %582 = vmatprep.subr.mxu0 0.0
    %583 = vmatpush1.msra.mxu0 0.0
    %584 = vmatprep.subr.mxu0 0.0
    %585 = vmatpush1.msra.mxu0 0.0
    %586 = vmatprep.subr.mxu0 0.0
    %587 = vmatpush1.msra.mxu0 0.0
    %588 = vmatprep.subr.mxu0 0.0
    %589 = vmatpush1.msra.mxu0 0.0
    %590 = vmatprep.mubr.f32.mxu0 0.0
    %v591 = vand.u32 %v479, 4294901760
    %v592 = vsub.f32 %v479, %v591
    %v593 = vand.u32 %v592, 4294901760
    %v594 = vsub.f32 %v592, %v593
    %v595 = vand.u32 %v594, 4294901760
    %596 = vmatmul.mubr.f32.gmra.mrb[0].mxu0 %v595
    %v597 = vpop.f32.mrb[0].mxu0
    %v598 = vadd.f32 0.0, %v597
    %v599 = vpop.f32.mrb[0].mxu0
    %600 = vmatprep.mubr.f32.mxu0 0.0
    %v601 = vand.u32 %v482, 4294901760
    %v602 = vsub.f32 %v482, %v601
    %v603 = vand.u32 %v602, 4294901760
    %v604 = vsub.f32 %v602, %v603
    %v605 = vand.u32 %v604, 4294901760
    %606 = vmatmul.mubr.f32.gmra.mrb[0].mxu0 %v605
    %v607 = vpop.f32.mrb[0].mxu0
    %v608 = vadd.f32 0.0, %v607
    %v609 = vpop.f32.mrb[0].mxu0
    %610 = vmatprep.mubr.f32.mxu0 0.0
    %v611 = vand.u32 %v485, 4294901760
    %v612 = vsub.f32 %v485, %v611
    %v613 = vand.u32 %v612, 4294901760
    %v614 = vsub.f32 %v612, %v613
    %v615 = vand.u32 %v614, 4294901760
    %616 = vmatmul.mubr.f32.gmra.mrb[0].mxu0 %v615
    %v617 = vpop.f32.mrb[0].mxu0
    %v618 = vadd.f32 0.0, %v617
    %v619 = vpop.f32.mrb[0].mxu0
    %620 = vmatprep.mubr.f32.mxu0 0.0
    %v621 = vand.u32 %v488, 4294901760
    %v622 = vsub.f32 %v488, %v621
    %v623 = vand.u32 %v622, 4294901760
    %v624 = vsub.f32 %v622, %v623
    %v625 = vand.u32 %v624, 4294901760
    %626 = vmatmul.mubr.f32.gmra.mrb[0].mxu0 %v625
    %v627 = vpop.f32.mrb[0].mxu0
    %v628 = vadd.f32 0.0, %v627
    %v629 = vpop.f32.mrb[0].mxu0
    %630 = vmatprep.mubr.f32.mxu0 0.0
    %v631 = vand.u32 %v491, 4294901760
    %v632 = vsub.f32 %v491, %v631
    %v633 = vand.u32 %v632, 4294901760
    %v634 = vsub.f32 %v632, %v633
    %v635 = vand.u32 %v634, 4294901760
    %636 = vmatmul.mubr.f32.gmra.mrb[0].mxu0 %v635
    %v637 = vpop.f32.mrb[0].mxu0
    %v638 = vadd.f32 0.0, %v637
    %v639 = vpop.f32.mrb[0].mxu0
    %640 = vmatprep.mubr.f32.mxu0 0.0
    %v641 = vand.u32 %v494, 4294901760
    %v642 = vsub.f32 %v494, %v641
    %v643 = vand.u32 %v642, 4294901760
    %v644 = vsub.f32 %v642, %v643
    %v645 = vand.u32 %v644, 4294901760
    %646 = vmatmul.mubr.f32.gmra.mrb[0].mxu0 %v645
    %v647 = vpop.f32.mrb[0].mxu0
    %v648 = vadd.f32 0.0, %v647
    %v649 = vpop.f32.mrb[0].mxu0
    %650 = vmatprep.mubr.f32.mxu0 0.0
    %v651 = vand.u32 %v497, 4294901760
    %v652 = vsub.f32 %v497, %v651
    %v653 = vand.u32 %v652, 4294901760
    %v654 = vsub.f32 %v652, %v653
    %v655 = vand.u32 %v654, 4294901760
    %656 = vmatmul.mubr.f32.gmra.mrb[0].mxu0 %v655
    %v657 = vpop.f32.mrb[0].mxu0
    %v658 = vadd.f32 0.0, %v657
    %v659 = vpop.f32.mrb[0].mxu0
    %660 = vmatprep.mubr.f32.mxu0 0.0
    %v661 = vand.u32 %v500, 4294901760
    %v662 = vsub.f32 %v500, %v661
    %v663 = vand.u32 %v662, 4294901760
    %v664 = vsub.f32 %v662, %v663
    %v665 = vand.u32 %v664, 4294901760
    %666 = vmatmul.mubr.f32.gmra.mrb[0].mxu0 %v665
    %v667 = vpop.f32.mrb[0].mxu0
    %v668 = vadd.f32 0.0, %v667
    %v669 = vpop.f32.mrb[0].mxu0
    %670 = vmatprep.mubr.f32.mxu0 0.0
    %v671 = vand.u32 %v503, 4294901760
    %v672 = vsub.f32 %v503, %v671
    %v673 = vand.u32 %v672, 4294901760
    %v674 = vsub.f32 %v672, %v673
    %v675 = vand.u32 %v674, 4294901760
    %676 = vmatmul.mubr.f32.gmra.mrb[0].mxu0 %v675
    %v677 = vpop.f32.mrb[0].mxu0
    %v678 = vadd.f32 0.0, %v677
    %v679 = vpop.f32.mrb[0].mxu0
    %680 = vmatprep.mubr.f32.mxu0 0.0
    %v681 = vand.u32 %v506, 4294901760
    %v682 = vsub.f32 %v506, %v681
    %v683 = vand.u32 %v682, 4294901760
    %v684 = vsub.f32 %v682, %v683
    %v685 = vand.u32 %v684, 4294901760
    %686 = vmatmul.mubr.f32.gmra.mrb[0].mxu0 %v685
    %v687 = vpop.f32.mrb[0].mxu0
    %v688 = vadd.f32 0.0, %v687
    %v689 = vpop.f32.mrb[0].mxu0
    %690 = vmatprep.mubr.f32.mxu0 0.0
    %v691 = vand.u32 %v509, 4294901760
    %v692 = vsub.f32 %v509, %v691
    %v693 = vand.u32 %v692, 4294901760
    %v694 = vsub.f32 %v692, %v693
    %v695 = vand.u32 %v694, 4294901760
    %696 = vmatmul.mubr.f32.gmra.mrb[0].mxu0 %v695
    %v697 = vpop.f32.mrb[0].mxu0
    %v698 = vadd.f32 0.0, %v697
    %v699 = vpop.f32.mrb[0].mxu0
    %700 = vmatprep.mubr.f32.mxu0 0.0
    %v701 = vand.u32 %v512, 4294901760
    %v702 = vsub.f32 %v512, %v701
    %v703 = vand.u32 %v702, 4294901760
    %v704 = vsub.f32 %v702, %v703
    %v705 = vand.u32 %v704, 4294901760
    %706 = vmatmul.mubr.f32.gmra.mrb[0].mxu0 %v705
    %v707 = vpop.f32.mrb[0].mxu0
    %v708 = vadd.f32 0.0, %v707
    %v709 = vpop.f32.mrb[0].mxu0
    %710 = vmatprep.mubr.f32.mxu0 0.0
    %v711 = vand.u32 %v515, 4294901760
    %v712 = vsub.f32 %v515, %v711
    %v713 = vand.u32 %v712, 4294901760
    %v714 = vsub.f32 %v712, %v713
    %v715 = vand.u32 %v714, 4294901760
    %716 = vmatmul.mubr.f32.gmra.mrb[0].mxu0 %v715
    %v717 = vpop.f32.mrb[0].mxu0
    %v718 = vadd.f32 0.0, %v717
    %v719 = vpop.f32.mrb[0].mxu0
    %720 = vmatprep.mubr.f32.mxu0 0.0
    %v721 = vand.u32 %v518, 4294901760
    %v722 = vsub.f32 %v518, %v721
    %v723 = vand.u32 %v722, 4294901760
    %v724 = vsub.f32 %v722, %v723
    %v725 = vand.u32 %v724, 4294901760
    %726 = vmatmul.mubr.f32.gmra.mrb[0].mxu0 %v725
    %v727 = vpop.f32.mrb[0].mxu0
    %v728 = vadd.f32 0.0, %v727
    %v729 = vpop.f32.mrb[0].mxu0
    %730 = vmatprep.mubr.f32.mxu0 0.0
    %v731 = vand.u32 %v521, 4294901760
    %v732 = vsub.f32 %v521, %v731
    %v733 = vand.u32 %v732, 4294901760
    %v734 = vsub.f32 %v732, %v733
    %v735 = vand.u32 %v734, 4294901760
    %736 = vmatmul.mubr.f32.gmra.mrb[0].mxu0 %v735
    %v737 = vpop.f32.mrb[0].mxu0
    %v738 = vadd.f32 0.0, %v737
    %v739 = vpop.f32.mrb[0].mxu0
    %740 = vmatprep.mubr.f32.mxu0 0.0
    %v741 = vand.u32 %v524, 4294901760
    %v742 = vsub.f32 %v524, %v741
    %v743 = vand.u32 %v742, 4294901760
    %v744 = vsub.f32 %v742, %v743
    %v745 = vand.u32 %v744, 4294901760
    %746 = vmatmul.mubr.f32.gmra.mrb[0].mxu0 %v745
    %v747 = vpop.f32.mrb[0].mxu0
    %v748 = vadd.f32 0.0, %v747
    %v749 = vpop.f32.mrb[0].mxu0
    %750 = vdwg.mxu0
    %751 = vmatprep.subr.mxu0 0.0
    %v752 = vsub.f32 %v312, %v312
    %v753 = vand.u32 %v752, 4294901760
    %v754 = vsub.f32 %v752, %v753
    %v755 = vand.u32 %v754, 4294901760
    %756 = vmatpush1.msra.mxu0 %v755
    %757 = vmatprep.subr.mxu0 0.0
    %v758 = vsub.f32 %v313, %v313
    %v759 = vand.u32 %v758, 4294901760
    %v760 = vsub.f32 %v758, %v759
    %v761 = vand.u32 %v760, 4294901760
    %762 = vmatpush1.msra.mxu0 %v761
    %763 = vmatprep.subr.mxu0 0.0
    %v764 = vsub.f32 %v314, %v314
    %v765 = vand.u32 %v764, 4294901760
    %v766 = vsub.f32 %v764, %v765
    %v767 = vand.u32 %v766, 4294901760
    %768 = vmatpush1.msra.mxu0 %v767
    %769 = vmatprep.subr.mxu0 0.0
    %v770 = vsub.f32 %v315, %v315
    %v771 = vand.u32 %v770, 4294901760
    %v772 = vsub.f32 %v770, %v771
    %v773 = vand.u32 %v772, 4294901760
    %774 = vmatpush1.msra.mxu0 %v773
    %775 = vmatprep.subr.mxu0 0.0
    %776 = vmatpush1.msra.mxu0 0.0
    %777 = vmatprep.subr.mxu0 0.0
    %778 = vmatpush1.msra.mxu0 0.0
    %779 = vmatprep.subr.mxu0 0.0
    %780 = vmatpush1.msra.mxu0 0.0
    %781 = vmatprep.subr.mxu0 0.0
    %782 = vmatpush1.msra.mxu0 0.0
    %783 = vmatprep.subr.mxu0 0.0
    %784 = vmatpush1.msra.mxu0 0.0
    %785 = vmatprep.subr.mxu0 0.0
    %786 = vmatpush1.msra.mxu0 0.0
    %787 = vmatprep.subr.mxu0 0.0
    %788 = vmatpush1.msra.mxu0 0.0
    %789 = vmatprep.subr.mxu0 0.0
    %790 = vmatpush1.msra.mxu0 0.0
    %791 = vmatprep.subr.mxu0 0.0
    %792 = vmatpush1.msra.mxu0 0.0
    %793 = vmatprep.subr.mxu0 0.0
    %794 = vmatpush1.msra.mxu0 0.0
    %795 = vmatprep.subr.mxu0 0.0
    %796 = vmatpush1.msra.mxu0 0.0
    %797 = vmatprep.subr.mxu0 0.0
    %798 = vmatpush1.msra.mxu0 0.0
    %799 = vmatprep.subr.mxu0 0.0
    %800 = vmatpush1.msra.mxu0 0.0
    %801 = vmatprep.subr.mxu0 0.0
    %802 = vmatpush1.msra.mxu0 0.0
    %803 = vmatprep.subr.mxu0 0.0
    %804 = vmatpush1.msra.mxu0 0.0
    %805 = vmatprep.subr.mxu0 0.0
    %806 = vmatpush1.msra.mxu0 0.0
    %807 = vmatprep.subr.mxu0 0.0
    %808 = vmatpush1.msra.mxu0 0.0
    %809 = vmatprep.subr.mxu0 0.0
    %810 = vmatpush1.msra.mxu0 0.0
    %811 = vmatprep.subr.mxu0 0.0
    %812 = vmatpush1.msra.mxu0 0.0
    %813 = vmatprep.subr.mxu0 0.0
    %814 = vmatpush1.msra.mxu0 0.0
    %815 = vmatprep.subr.mxu0 0.0
    %816 = vmatpush1.msra.mxu0 0.0
    %817 = vmatprep.subr.mxu0 0.0
    %818 = vmatpush1.msra.mxu0 0.0
    %819 = vmatprep.subr.mxu0 0.0
    %820 = vmatpush1.msra.mxu0 0.0
    %821 = vmatprep.subr.mxu0 0.0
    %822 = vmatpush1.msra.mxu0 0.0
    %823 = vmatprep.subr.mxu0 0.0
    %824 = vmatpush1.msra.mxu0 0.0
    %825 = vmatprep.subr.mxu0 0.0
    %826 = vmatpush1.msra.mxu0 0.0
    %827 = vmatprep.subr.mxu0 0.0
    %828 = vmatpush1.msra.mxu0 0.0
    %829 = vmatprep.subr.mxu0 0.0
    %830 = vmatpush1.msra.mxu0 0.0
    %831 = vmatprep.mubr.f32.mxu0 0.0
    %v832 = vand.u32 %v479, 4294901760
    %833 = vmatmul.mubr.f32.gmra.mrb[0].mxu0 %v832
    %v834 = vpop.f32.mrb[0].mxu0
    %v835 = vadd.f32 %v598, %v834
    %v836 = vpop.f32.mrb[0].mxu0
    %837 = vmatprep.mubr.f32.mxu0 0.0
    %v838 = vand.u32 %v482, 4294901760
    %839 = vmatmul.mubr.f32.gmra.mrb[0].mxu0 %v838
    %v840 = vpop.f32.mrb[0].mxu0
    %v841 = vadd.f32 %v608, %v840
    %v842 = vpop.f32.mrb[0].mxu0
    %843 = vmatprep.mubr.f32.mxu0 0.0
    %v844 = vand.u32 %v485, 4294901760
    %845 = vmatmul.mubr.f32.gmra.mrb[0].mxu0 %v844
    %v846 = vpop.f32.mrb[0].mxu0
    %v847 = vadd.f32 %v618, %v846
    %v848 = vpop.f32.mrb[0].mxu0
    %849 = vmatprep.mubr.f32.mxu0 0.0
    %v850 = vand.u32 %v488, 4294901760
    %851 = vmatmul.mubr.f32.gmra.mrb[0].mxu0 %v850
    %v852 = vpop.f32.mrb[0].mxu0
    %v853 = vadd.f32 %v628, %v852
    %v854 = vpop.f32.mrb[0].mxu0
    %855 = vmatprep.mubr.f32.mxu0 0.0
    %v856 = vand.u32 %v491, 4294901760
    %857 = vmatmul.mubr.f32.gmra.mrb[0].mxu0 %v856
    %v858 = vpop.f32.mrb[0].mxu0
    %v859 = vadd.f32 %v638, %v858
    %v860 = vpop.f32.mrb[0].mxu0
    %861 = vmatprep.mubr.f32.mxu0 0.0
    %v862 = vand.u32 %v494, 4294901760
    %863 = vmatmul.mubr.f32.gmra.mrb[0].mxu0 %v862
    %v864 = vpop.f32.mrb[0].mxu0
    %v865 = vadd.f32 %v648, %v864
    %v866 = vpop.f32.mrb[0].mxu0
    %867 = vmatprep.mubr.f32.mxu0 0.0
    %v868 = vand.u32 %v497, 4294901760
    %869 = vmatmul.mubr.f32.gmra.mrb[0].mxu0 %v868
    %v870 = vpop.f32.mrb[0].mxu0
    %v871 = vadd.f32 %v658, %v870
    %v872 = vpop.f32.mrb[0].mxu0
    %873 = vmatprep.mubr.f32.mxu0 0.0
    %v874 = vand.u32 %v500, 4294901760
    %875 = vmatmul.mubr.f32.gmra.mrb[0].mxu0 %v874
    %v876 = vpop.f32.mrb[0].mxu0
    %v877 = vadd.f32 %v668, %v876
    %v878 = vpop.f32.mrb[0].mxu0
    %879 = vmatprep.mubr.f32.mxu0 0.0
    %v880 = vand.u32 %v503, 4294901760
    %881 = vmatmul.mubr.f32.gmra.mrb[0].mxu0 %v880
    %v882 = vpop.f32.mrb[0].mxu0
    %v883 = vadd.f32 %v678, %v882
    %v884 = vpop.f32.mrb[0].mxu0
    %885 = vmatprep.mubr.f32.mxu0 0.0
    %v886 = vand.u32 %v506, 4294901760
    %887 = vmatmul.mubr.f32.gmra.mrb[0].mxu0 %v886
    %v888 = vpop.f32.mrb[0].mxu0
    %v889 = vadd.f32 %v688, %v888
    %v890 = vpop.f32.mrb[0].mxu0
    %891 = vmatprep.mubr.f32.mxu0 0.0
    %v892 = vand.u32 %v509, 4294901760
    %893 = vmatmul.mubr.f32.gmra.mrb[0].mxu0 %v892
    %v894 = vpop.f32.mrb[0].mxu0
    %v895 = vadd.f32 %v698, %v894
    %v896 = vpop.f32.mrb[0].mxu0
    %897 = vmatprep.mubr.f32.mxu0 0.0
    %v898 = vand.u32 %v512, 4294901760
    %899 = vmatmul.mubr.f32.gmra.mrb[0].mxu0 %v898
    %v900 = vpop.f32.mrb[0].mxu0
    %v901 = vadd.f32 %v708, %v900
    %v902 = vpop.f32.mrb[0].mxu0
    %903 = vmatprep.mubr.f32.mxu0 0.0
    %v904 = vand.u32 %v515, 4294901760
    %905 = vmatmul.mubr.f32.gmra.mrb[0].mxu0 %v904
    %v906 = vpop.f32.mrb[0].mxu0
    %v907 = vadd.f32 %v718, %v906
    %v908 = vpop.f32.mrb[0].mxu0
    %909 = vmatprep.mubr.f32.mxu0 0.0
    %v910 = vand.u32 %v518, 4294901760
    %911 = vmatmul.mubr.f32.gmra.mrb[0].mxu0 %v910
    %v912 = vpop.f32.mrb[0].mxu0
    %v913 = vadd.f32 %v728, %v912
    %v914 = vpop.f32.mrb[0].mxu0
    %915 = vmatprep.mubr.f32.mxu0 0.0
    %v916 = vand.u32 %v521, 4294901760
    %917 = vmatmul.mubr.f32.gmra.mrb[0].mxu0 %v916
    %v918 = vpop.f32.mrb[0].mxu0
    %v919 = vadd.f32 %v738, %v918
    %v920 = vpop.f32.mrb[0].mxu0
    %921 = vmatprep.mubr.f32.mxu0 0.0
    %v922 = vand.u32 %v524, 4294901760
    %923 = vmatmul.mubr.f32.gmra.mrb[0].mxu0 %v922
    %v924 = vpop.f32.mrb[0].mxu0
    %v925 = vadd.f32 %v748, %v924
    %v926 = vpop.f32.mrb[0].mxu0
    %927 = vdwg.mxu0
    %928 = vmatprep.subr.mxu0 0.0
    %v929 = vsub.f32 %v312, %v312
    %930 = vmatpush1.msra.mxu0 %v929
    %931 = vmatprep.subr.mxu0 0.0
    %v932 = vsub.f32 %v313, %v313
    %933 = vmatpush1.msra.mxu0 %v932
    %934 = vmatprep.subr.mxu0 0.0
    %v935 = vsub.f32 %v314, %v314
    %936 = vmatpush1.msra.mxu0 %v935
    %937 = vmatprep.subr.mxu0 0.0
    %v938 = vsub.f32 %v315, %v315
    %939 = vmatpush1.msra.mxu0 %v938
    %940 = vmatprep.subr.mxu0 0.0
    %941 = vmatpush1.msra.mxu0 0.0
    %942 = vmatprep.subr.mxu0 0.0
    %943 = vmatpush1.msra.mxu0 0.0
    %944 = vmatprep.subr.mxu0 0.0
    %945 = vmatpush1.msra.mxu0 0.0
    %946 = vmatprep.subr.mxu0 0.0
    %947 = vmatpush1.msra.mxu0 0.0
    %948 = vmatprep.subr.mxu0 0.0
    %949 = vmatpush1.msra.mxu0 0.0
    %950 = vmatprep.subr.mxu0 0.0
    %951 = vmatpush1.msra.mxu0 0.0
    %952 = vmatprep.subr.mxu0 0.0
    %953 = vmatpush1.msra.mxu0 0.0
    %954 = vmatprep.subr.mxu0 0.0
    %955 = vmatpush1.msra.mxu0 0.0
    %956 = vmatprep.subr.mxu0 0.0
    %957 = vmatpush1.msra.mxu0 0.0
    %958 = vmatprep.subr.mxu0 0.0
    %959 = vmatpush1.msra.mxu0 0.0
    %960 = vmatprep.subr.mxu0 0.0
    %961 = vmatpush1.msra.mxu0 0.0
    %962 = vmatprep.subr.mxu0 0.0
    %963 = vmatpush1.msra.mxu0 0.0
    %964 = vmatprep.subr.mxu0 0.0
    %965 = vmatpush1.msra.mxu0 0.0
    %966 = vmatprep.subr.mxu0 0.0
    %967 = vmatpush1.msra.mxu0 0.0
    %968 = vmatprep.subr.mxu0 0.0
    %969 = vmatpush1.msra.mxu0 0.0
    %970 = vmatprep.subr.mxu0 0.0
    %971 = vmatpush1.msra.mxu0 0.0
    %972 = vmatprep.subr.mxu0 0.0
    %973 = vmatpush1.msra.mxu0 0.0
    %974 = vmatprep.subr.mxu0 0.0
    %975 = vmatpush1.msra.mxu0 0.0
    %976 = vmatprep.subr.mxu0 0.0
    %977 = vmatpush1.msra.mxu0 0.0
    %978 = vmatprep.subr.mxu0 0.0
    %979 = vmatpush1.msra.mxu0 0.0
    %980 = vmatprep.subr.mxu0 0.0
    %981 = vmatpush1.msra.mxu0 0.0
    %982 = vmatprep.subr.mxu0 0.0
    %983 = vmatpush1.msra.mxu0 0.0
    %984 = vmatprep.subr.mxu0 0.0
    %985 = vmatpush1.msra.mxu0 0.0
    %986 = vmatprep.subr.mxu0 0.0
    %987 = vmatpush1.msra.mxu0 0.0
    %988 = vmatprep.subr.mxu0 0.0
    %989 = vmatpush1.msra.mxu0 0.0
    %990 = vmatprep.subr.mxu0 0.0
    %991 = vmatpush1.msra.mxu0 0.0
    %992 = vmatprep.subr.mxu0 0.0
    %993 = vmatpush1.msra.mxu0 0.0
    %994 = vmatprep.subr.mxu0 0.0
    %995 = vmatpush1.msra.mxu0 0.0
    %996 = vmatprep.mubr.f32.mxu0 0.0
    %v997 = vand.u32 %v479, 4294901760
    %v998 = vsub.f32 %v479, %v997
    %999 = vmatmul.mubr.f32.gmra.mrb[0].mxu0 %v998
    %v1000 = vpop.f32.mrb[0].mxu0
    %v1001 = vadd.f32 %v835, %v1000
    %v1002 = vpop.f32.mrb[0].mxu0
    %1003 = vmatprep.mubr.f32.mxu0 0.0
    %v1004 = vand.u32 %v482, 4294901760
    %v1005 = vsub.f32 %v482, %v1004
    %1006 = vmatmul.mubr.f32.gmra.mrb[0].mxu0 %v1005
    %v1007 = vpop.f32.mrb[0].mxu0
    %v1008 = vadd.f32 %v841, %v1007
    %v1009 = vpop.f32.mrb[0].mxu0
    %1010 = vmatprep.mubr.f32.mxu0 0.0
    %v1011 = vand.u32 %v485, 4294901760
    %v1012 = vsub.f32 %v485, %v1011
    %1013 = vmatmul.mubr.f32.gmra.mrb[0].mxu0 %v1012
    %v1014 = vpop.f32.mrb[0].mxu0
    %v1015 = vadd.f32 %v847, %v1014
    %v1016 = vpop.f32.mrb[0].mxu0
    %1017 = vmatprep.mubr.f32.mxu0 0.0
    %v1018 = vand.u32 %v488, 4294901760
    %v1019 = vsub.f32 %v488, %v1018
    %1020 = vmatmul.mubr.f32.gmra.mrb[0].mxu0 %v1019
    %v1021 = vpop.f32.mrb[0].mxu0
    %v1022 = vadd.f32 %v853, %v1021
    %v1023 = vpop.f32.mrb[0].mxu0
    %1024 = vmatprep.mubr.f32.mxu0 0.0
    %v1025 = vand.u32 %v491, 4294901760
    %v1026 = vsub.f32 %v491, %v1025
    %1027 = vmatmul.mubr.f32.gmra.mrb[0].mxu0 %v1026
    %v1028 = vpop.f32.mrb[0].mxu0
    %v1029 = vadd.f32 %v859, %v1028
    %v1030 = vpop.f32.mrb[0].mxu0
    %1031 = vmatprep.mubr.f32.mxu0 0.0
    %v1032 = vand.u32 %v494, 4294901760
    %v1033 = vsub.f32 %v494, %v1032
    %1034 = vmatmul.mubr.f32.gmra.mrb[0].mxu0 %v1033
    %v1035 = vpop.f32.mrb[0].mxu0
    %v1036 = vadd.f32 %v865, %v1035
    %v1037 = vpop.f32.mrb[0].mxu0
    %1038 = vmatprep.mubr.f32.mxu0 0.0
    %v1039 = vand.u32 %v497, 4294901760
    %v1040 = vsub.f32 %v497, %v1039
    %1041 = vmatmul.mubr.f32.gmra.mrb[0].mxu0 %v1040
    %v1042 = vpop.f32.mrb[0].mxu0
    %v1043 = vadd.f32 %v871, %v1042
    %v1044 = vpop.f32.mrb[0].mxu0
    %1045 = vmatprep.mubr.f32.mxu0 0.0
    %v1046 = vand.u32 %v500, 4294901760
    %v1047 = vsub.f32 %v500, %v1046
    %1048 = vmatmul.mubr.f32.gmra.mrb[0].mxu0 %v1047
    %v1049 = vpop.f32.mrb[0].mxu0
    %v1050 = vadd.f32 %v877, %v1049
    %v1051 = vpop.f32.mrb[0].mxu0
    %1052 = vmatprep.mubr.f32.mxu0 0.0
    %v1053 = vand.u32 %v503, 4294901760
    %v1054 = vsub.f32 %v503, %v1053
    %1055 = vmatmul.mubr.f32.gmra.mrb[0].mxu0 %v1054
    %v1056 = vpop.f32.mrb[0].mxu0
    %v1057 = vadd.f32 %v883, %v1056
    %v1058 = vpop.f32.mrb[0].mxu0
    %1059 = vmatprep.mubr.f32.mxu0 0.0
    %v1060 = vand.u32 %v506, 4294901760
    %v1061 = vsub.f32 %v506, %v1060
    %1062 = vmatmul.mubr.f32.gmra.mrb[0].mxu0 %v1061
    %v1063 = vpop.f32.mrb[0].mxu0
    %v1064 = vadd.f32 %v889, %v1063
    %v1065 = vpop.f32.mrb[0].mxu0
    %1066 = vmatprep.mubr.f32.mxu0 0.0
    %v1067 = vand.u32 %v509, 4294901760
    %v1068 = vsub.f32 %v509, %v1067
    %1069 = vmatmul.mubr.f32.gmra.mrb[0].mxu0 %v1068
    %v1070 = vpop.f32.mrb[0].mxu0
    %v1071 = vadd.f32 %v895, %v1070
    %v1072 = vpop.f32.mrb[0].mxu0
    %1073 = vmatprep.mubr.f32.mxu0 0.0
    %v1074 = vand.u32 %v512, 4294901760
    %v1075 = vsub.f32 %v512, %v1074
    %1076 = vmatmul.mubr.f32.gmra.mrb[0].mxu0 %v1075
    %v1077 = vpop.f32.mrb[0].mxu0
    %v1078 = vadd.f32 %v901, %v1077
    %v1079 = vpop.f32.mrb[0].mxu0
    %1080 = vmatprep.mubr.f32.mxu0 0.0
    %v1081 = vand.u32 %v515, 4294901760
    %v1082 = vsub.f32 %v515, %v1081
    %1083 = vmatmul.mubr.f32.gmra.mrb[0].mxu0 %v1082
    %v1084 = vpop.f32.mrb[0].mxu0
    %v1085 = vadd.f32 %v907, %v1084
    %v1086 = vpop.f32.mrb[0].mxu0
    %1087 = vmatprep.mubr.f32.mxu0 0.0
    %v1088 = vand.u32 %v518, 4294901760
    %v1089 = vsub.f32 %v518, %v1088
    %1090 = vmatmul.mubr.f32.gmra.mrb[0].mxu0 %v1089
    %v1091 = vpop.f32.mrb[0].mxu0
    %v1092 = vadd.f32 %v913, %v1091
    %v1093 = vpop.f32.mrb[0].mxu0
    %1094 = vmatprep.mubr.f32.mxu0 0.0
    %v1095 = vand.u32 %v521, 4294901760
    %v1096 = vsub.f32 %v521, %v1095
    %1097 = vmatmul.mubr.f32.gmra.mrb[0].mxu0 %v1096
    %v1098 = vpop.f32.mrb[0].mxu0
    %v1099 = vadd.f32 %v919, %v1098
    %v1100 = vpop.f32.mrb[0].mxu0
    %1101 = vmatprep.mubr.f32.mxu0 0.0
    %v1102 = vand.u32 %v524, 4294901760
    %v1103 = vsub.f32 %v524, %v1102
    %1104 = vmatmul.mubr.f32.gmra.mrb[0].mxu0 %v1103
    %v1105 = vpop.f32.mrb[0].mxu0
    %v1106 = vadd.f32 %v925, %v1105
    %v1107 = vpop.f32.mrb[0].mxu0
    %1108 = vdwg.mxu0
    %1109 = vmatprep.subr.mxu0 0.0
    %1110 = vmatpush1.msra.mxu0 %v312
    %1111 = vmatprep.subr.mxu0 0.0
    %1112 = vmatpush1.msra.mxu0 %v313
    %1113 = vmatprep.subr.mxu0 0.0
    %1114 = vmatpush1.msra.mxu0 %v314
    %1115 = vmatprep.subr.mxu0 0.0
    %1116 = vmatpush1.msra.mxu0 %v315
    %1117 = vmatprep.subr.mxu0 0.0
    %1118 = vmatpush1.msra.mxu0 0.0
    %1119 = vmatprep.subr.mxu0 0.0
    %1120 = vmatpush1.msra.mxu0 0.0
    %1121 = vmatprep.subr.mxu0 0.0
    %1122 = vmatpush1.msra.mxu0 0.0
    %1123 = vmatprep.subr.mxu0 0.0
    %1124 = vmatpush1.msra.mxu0 0.0
    %1125 = vmatprep.subr.mxu0 0.0
    %1126 = vmatpush1.msra.mxu0 0.0
    %1127 = vmatprep.subr.mxu0 0.0
    %1128 = vmatpush1.msra.mxu0 0.0
    %1129 = vmatprep.subr.mxu0 0.0
    %1130 = vmatpush1.msra.mxu0 0.0
    %1131 = vmatprep.subr.mxu0 0.0
    %1132 = vmatpush1.msra.mxu0 0.0
    %1133 = vmatprep.subr.mxu0 0.0
    %1134 = vmatpush1.msra.mxu0 0.0
    %1135 = vmatprep.subr.mxu0 0.0
    %1136 = vmatpush1.msra.mxu0 0.0
    %1137 = vmatprep.subr.mxu0 0.0
    %1138 = vmatpush1.msra.mxu0 0.0
    %1139 = vmatprep.subr.mxu0 0.0
    %1140 = vmatpush1.msra.mxu0 0.0
    %1141 = vmatprep.subr.mxu0 0.0
    %1142 = vmatpush1.msra.mxu0 0.0
    %1143 = vmatprep.subr.mxu0 0.0
    %1144 = vmatpush1.msra.mxu0 0.0
    %1145 = vmatprep.subr.mxu0 0.0
    %1146 = vmatpush1.msra.mxu0 0.0
    %1147 = vmatprep.subr.mxu0 0.0
    %1148 = vmatpush1.msra.mxu0 0.0
    %1149 = vmatprep.subr.mxu0 0.0
    %1150 = vmatpush1.msra.mxu0 0.0
    %1151 = vmatprep.subr.mxu0 0.0
    %1152 = vmatpush1.msra.mxu0 0.0
    %1153 = vmatprep.subr.mxu0 0.0
    %1154 = vmatpush1.msra.mxu0 0.0
    %1155 = vmatprep.subr.mxu0 0.0
    %1156 = vmatpush1.msra.mxu0 0.0
    %1157 = vmatprep.subr.mxu0 0.0
    %1158 = vmatpush1.msra.mxu0 0.0
    %1159 = vmatprep.subr.mxu0 0.0
    %1160 = vmatpush1.msra.mxu0 0.0
    %1161 = vmatprep.subr.mxu0 0.0
    %1162 = vmatpush1.msra.mxu0 0.0
    %1163 = vmatprep.subr.mxu0 0.0
    %1164 = vmatpush1.msra.mxu0 0.0
    %1165 = vmatprep.subr.mxu0 0.0
    %1166 = vmatpush1.msra.mxu0 0.0
    %1167 = vmatprep.subr.mxu0 0.0
    %1168 = vmatpush1.msra.mxu0 0.0
    %1169 = vmatprep.subr.mxu0 0.0
    %1170 = vmatpush1.msra.mxu0 0.0
    %1171 = vmatprep.subr.mxu0 0.0
    %1172 = vmatpush1.msra.mxu0 0.0
    %1173 = vmatprep.mubr.f32.mxu0 0.0
    %v1174 = vand.u32 %v479, 4294901760
    %v1175 = vsub.f32 %v479, %v1174
    %v1176 = vand.u32 %v1175, 4294901760
    %1177 = vmatmul.mubr.f32.gmra.mrb[0].mxu0 %v1176
    %v1178 = vpop.f32.mrb[0].mxu0
    %v1179 = vadd.f32 %v1001, %v1178
    %v1180 = vpop.f32.mrb[0].mxu0
    %1181 = vmatprep.mubr.f32.mxu0 0.0
    %v1182 = vand.u32 %v482, 4294901760
    %v1183 = vsub.f32 %v482, %v1182
    %v1184 = vand.u32 %v1183, 4294901760
    %1185 = vmatmul.mubr.f32.gmra.mrb[0].mxu0 %v1184
    %v1186 = vpop.f32.mrb[0].mxu0
    %v1187 = vadd.f32 %v1008, %v1186
    %v1188 = vpop.f32.mrb[0].mxu0
    %1189 = vmatprep.mubr.f32.mxu0 0.0
    %v1190 = vand.u32 %v485, 4294901760
    %v1191 = vsub.f32 %v485, %v1190
    %v1192 = vand.u32 %v1191, 4294901760
    %1193 = vmatmul.mubr.f32.gmra.mrb[0].mxu0 %v1192
    %v1194 = vpop.f32.mrb[0].mxu0
    %v1195 = vadd.f32 %v1015, %v1194
    %v1196 = vpop.f32.mrb[0].mxu0
    %1197 = vmatprep.mubr.f32.mxu0 0.0
    %v1198 = vand.u32 %v488, 4294901760
    %v1199 = vsub.f32 %v488, %v1198
    %v1200 = vand.u32 %v1199, 4294901760
    %1201 = vmatmul.mubr.f32.gmra.mrb[0].mxu0 %v1200
    %v1202 = vpop.f32.mrb[0].mxu0
    %v1203 = vadd.f32 %v1022, %v1202
    %v1204 = vpop.f32.mrb[0].mxu0
    %1205 = vmatprep.mubr.f32.mxu0 0.0
    %v1206 = vand.u32 %v491, 4294901760
    %v1207 = vsub.f32 %v491, %v1206
    %v1208 = vand.u32 %v1207, 4294901760
    %1209 = vmatmul.mubr.f32.gmra.mrb[0].mxu0 %v1208
    %v1210 = vpop.f32.mrb[0].mxu0
    %v1211 = vadd.f32 %v1029, %v1210
    %v1212 = vpop.f32.mrb[0].mxu0
    %1213 = vmatprep.mubr.f32.mxu0 0.0
    %v1214 = vand.u32 %v494, 4294901760
    %v1215 = vsub.f32 %v494, %v1214
    %v1216 = vand.u32 %v1215, 4294901760
    %1217 = vmatmul.mubr.f32.gmra.mrb[0].mxu0 %v1216
    %v1218 = vpop.f32.mrb[0].mxu0
    %v1219 = vadd.f32 %v1036, %v1218
    %v1220 = vpop.f32.mrb[0].mxu0
    %1221 = vmatprep.mubr.f32.mxu0 0.0
    %v1222 = vand.u32 %v497, 4294901760
    %v1223 = vsub.f32 %v497, %v1222
    %v1224 = vand.u32 %v1223, 4294901760
    %1225 = vmatmul.mubr.f32.gmra.mrb[0].mxu0 %v1224
    %v1226 = vpop.f32.mrb[0].mxu0
    %v1227 = vadd.f32 %v1043, %v1226
    %v1228 = vpop.f32.mrb[0].mxu0
    %1229 = vmatprep.mubr.f32.mxu0 0.0
    %v1230 = vand.u32 %v500, 4294901760
    %v1231 = vsub.f32 %v500, %v1230
    %v1232 = vand.u32 %v1231, 4294901760
    %1233 = vmatmul.mubr.f32.gmra.mrb[0].mxu0 %v1232
    %v1234 = vpop.f32.mrb[0].mxu0
    %v1235 = vadd.f32 %v1050, %v1234
    %v1236 = vpop.f32.mrb[0].mxu0
    %1237 = vmatprep.mubr.f32.mxu0 0.0
    %v1238 = vand.u32 %v503, 4294901760
    %v1239 = vsub.f32 %v503, %v1238
    %v1240 = vand.u32 %v1239, 4294901760
    %1241 = vmatmul.mubr.f32.gmra.mrb[0].mxu0 %v1240
    %v1242 = vpop.f32.mrb[0].mxu0
    %v1243 = vadd.f32 %v1057, %v1242
    %v1244 = vpop.f32.mrb[0].mxu0
    %1245 = vmatprep.mubr.f32.mxu0 0.0
    %v1246 = vand.u32 %v506, 4294901760
    %v1247 = vsub.f32 %v506, %v1246
    %v1248 = vand.u32 %v1247, 4294901760
    %1249 = vmatmul.mubr.f32.gmra.mrb[0].mxu0 %v1248
    %v1250 = vpop.f32.mrb[0].mxu0
    %v1251 = vadd.f32 %v1064, %v1250
    %v1252 = vpop.f32.mrb[0].mxu0
    %1253 = vmatprep.mubr.f32.mxu0 0.0
    %v1254 = vand.u32 %v509, 4294901760
    %v1255 = vsub.f32 %v509, %v1254
    %v1256 = vand.u32 %v1255, 4294901760
    %1257 = vmatmul.mubr.f32.gmra.mrb[0].mxu0 %v1256
    %v1258 = vpop.f32.mrb[0].mxu0
    %v1259 = vadd.f32 %v1071, %v1258
    %v1260 = vpop.f32.mrb[0].mxu0
    %1261 = vmatprep.mubr.f32.mxu0 0.0
    %v1262 = vand.u32 %v512, 4294901760
    %v1263 = vsub.f32 %v512, %v1262
    %v1264 = vand.u32 %v1263, 4294901760
    %1265 = vmatmul.mubr.f32.gmra.mrb[0].mxu0 %v1264
    %v1266 = vpop.f32.mrb[0].mxu0
    %v1267 = vadd.f32 %v1078, %v1266
    %v1268 = vpop.f32.mrb[0].mxu0
    %1269 = vmatprep.mubr.f32.mxu0 0.0
    %v1270 = vand.u32 %v515, 4294901760
    %v1271 = vsub.f32 %v515, %v1270
    %v1272 = vand.u32 %v1271, 4294901760
    %1273 = vmatmul.mubr.f32.gmra.mrb[0].mxu0 %v1272
    %v1274 = vpop.f32.mrb[0].mxu0
    %v1275 = vadd.f32 %v1085, %v1274
    %v1276 = vpop.f32.mrb[0].mxu0
    %1277 = vmatprep.mubr.f32.mxu0 0.0
    %v1278 = vand.u32 %v518, 4294901760
    %v1279 = vsub.f32 %v518, %v1278
    %v1280 = vand.u32 %v1279, 4294901760
    %1281 = vmatmul.mubr.f32.gmra.mrb[0].mxu0 %v1280
    %v1282 = vpop.f32.mrb[0].mxu0
    %v1283 = vadd.f32 %v1092, %v1282
    %v1284 = vpop.f32.mrb[0].mxu0
    %1285 = vmatprep.mubr.f32.mxu0 0.0
    %v1286 = vand.u32 %v521, 4294901760
    %v1287 = vsub.f32 %v521, %v1286
    %v1288 = vand.u32 %v1287, 4294901760
    %1289 = vmatmul.mubr.f32.gmra.mrb[0].mxu0 %v1288
    %v1290 = vpop.f32.mrb[0].mxu0
    %v1291 = vadd.f32 %v1099, %v1290
    %v1292 = vpop.f32.mrb[0].mxu0
    %1293 = vmatprep.mubr.f32.mxu0 0.0
    %v1294 = vand.u32 %v524, 4294901760
    %v1295 = vsub.f32 %v524, %v1294
    %v1296 = vand.u32 %v1295, 4294901760
    %1297 = vmatmul.mubr.f32.gmra.mrb[0].mxu0 %v1296
    %v1298 = vpop.f32.mrb[0].mxu0
    %v1299 = vadd.f32 %v1106, %v1298
    %v1300 = vpop.f32.mrb[0].mxu0
    %1301 = vdwg.mxu0
    %1302 = vmatprep.subr.mxu0 0.0
    %v1303 = vsub.f32 %v312, %v312
    %v1304 = vand.u32 %v1303, 4294901760
    %1305 = vmatpush1.msra.mxu0 %v1304
    %1306 = vmatprep.subr.mxu0 0.0
    %v1307 = vsub.f32 %v313, %v313
    %v1308 = vand.u32 %v1307, 4294901760
    %1309 = vmatpush1.msra.mxu0 %v1308
    %1310 = vmatprep.subr.mxu0 0.0
    %v1311 = vsub.f32 %v314, %v314
    %v1312 = vand.u32 %v1311, 4294901760
    %1313 = vmatpush1.msra.mxu0 %v1312
    %1314 = vmatprep.subr.mxu0 0.0
    %v1315 = vsub.f32 %v315, %v315
    %v1316 = vand.u32 %v1315, 4294901760
    %1317 = vmatpush1.msra.mxu0 %v1316
    %1318 = vmatprep.subr.mxu0 0.0
    %1319 = vmatpush1.msra.mxu0 0.0
    %1320 = vmatprep.subr.mxu0 0.0
    %1321 = vmatpush1.msra.mxu0 0.0
    %1322 = vmatprep.subr.mxu0 0.0
    %1323 = vmatpush1.msra.mxu0 0.0
    %1324 = vmatprep.subr.mxu0 0.0
    %1325 = vmatpush1.msra.mxu0 0.0
    %1326 = vmatprep.subr.mxu0 0.0
    %1327 = vmatpush1.msra.mxu0 0.0
    %1328 = vmatprep.subr.mxu0 0.0
    %1329 = vmatpush1.msra.mxu0 0.0
    %1330 = vmatprep.subr.mxu0 0.0
    %1331 = vmatpush1.msra.mxu0 0.0
    %1332 = vmatprep.subr.mxu0 0.0
    %1333 = vmatpush1.msra.mxu0 0.0
    %1334 = vmatprep.subr.mxu0 0.0
    %1335 = vmatpush1.msra.mxu0 0.0
    %1336 = vmatprep.subr.mxu0 0.0
    %1337 = vmatpush1.msra.mxu0 0.0
    %1338 = vmatprep.subr.mxu0 0.0
    %1339 = vmatpush1.msra.mxu0 0.0
    %1340 = vmatprep.subr.mxu0 0.0
    %1341 = vmatpush1.msra.mxu0 0.0
    %1342 = vmatprep.subr.mxu0 0.0
    %1343 = vmatpush1.msra.mxu0 0.0
    %1344 = vmatprep.subr.mxu0 0.0
    %1345 = vmatpush1.msra.mxu0 0.0
    %1346 = vmatprep.subr.mxu0 0.0
    %1347 = vmatpush1.msra.mxu0 0.0
    %1348 = vmatprep.subr.mxu0 0.0
    %1349 = vmatpush1.msra.mxu0 0.0
    %1350 = vmatprep.subr.mxu0 0.0
    %1351 = vmatpush1.msra.mxu0 0.0
    %1352 = vmatprep.subr.mxu0 0.0
    %1353 = vmatpush1.msra.mxu0 0.0
    %1354 = vmatprep.subr.mxu0 0.0
    %1355 = vmatpush1.msra.mxu0 0.0
    %1356 = vmatprep.subr.mxu0 0.0
    %1357 = vmatpush1.msra.mxu0 0.0
    %1358 = vmatprep.subr.mxu0 0.0
    %1359 = vmatpush1.msra.mxu0 0.0
    %1360 = vmatprep.subr.mxu0 0.0
    %1361 = vmatpush1.msra.mxu0 0.0
    %1362 = vmatprep.subr.mxu0 0.0
    %1363 = vmatpush1.msra.mxu0 0.0
    %1364 = vmatprep.subr.mxu0 0.0
    %1365 = vmatpush1.msra.mxu0 0.0
    %1366 = vmatprep.subr.mxu0 0.0
    %1367 = vmatpush1.msra.mxu0 0.0
    %1368 = vmatprep.subr.mxu0 0.0
    %1369 = vmatpush1.msra.mxu0 0.0
    %1370 = vmatprep.subr.mxu0 0.0
    %1371 = vmatpush1.msra.mxu0 0.0
    %1372 = vmatprep.subr.mxu0 0.0
    %1373 = vmatpush1.msra.mxu0 0.0
    %1374 = vmatprep.mubr.f32.mxu0 0.0
    %v1375 = vand.u32 %v479, 4294901760
    %1376 = vmatmul.mubr.f32.gmra.mrb[0].mxu0 %v1375
    %v1377 = vpop.f32.mrb[0].mxu0
    %v1378 = vadd.f32 %v1179, %v1377
    %v1379 = vpop.f32.mrb[0].mxu0
    %1380 = vmatprep.mubr.f32.mxu0 0.0
    %v1381 = vand.u32 %v482, 4294901760
    %1382 = vmatmul.mubr.f32.gmra.mrb[0].mxu0 %v1381
    %v1383 = vpop.f32.mrb[0].mxu0
    %v1384 = vadd.f32 %v1187, %v1383
    %v1385 = vpop.f32.mrb[0].mxu0
    %1386 = vmatprep.mubr.f32.mxu0 0.0
    %v1387 = vand.u32 %v485, 4294901760
    %1388 = vmatmul.mubr.f32.gmra.mrb[0].mxu0 %v1387
    %v1389 = vpop.f32.mrb[0].mxu0
    %v1390 = vadd.f32 %v1195, %v1389
    %v1391 = vpop.f32.mrb[0].mxu0
    %1392 = vmatprep.mubr.f32.mxu0 0.0
    %v1393 = vand.u32 %v488, 4294901760
    %1394 = vmatmul.mubr.f32.gmra.mrb[0].mxu0 %v1393
    %v1395 = vpop.f32.mrb[0].mxu0
    %v1396 = vadd.f32 %v1203, %v1395
    %v1397 = vpop.f32.mrb[0].mxu0
    %1398 = vmatprep.mubr.f32.mxu0 0.0
    %v1399 = vand.u32 %v491, 4294901760
    %1400 = vmatmul.mubr.f32.gmra.mrb[0].mxu0 %v1399
    %v1401 = vpop.f32.mrb[0].mxu0
    %v1402 = vadd.f32 %v1211, %v1401
    %v1403 = vpop.f32.mrb[0].mxu0
    %1404 = vmatprep.mubr.f32.mxu0 0.0
    %v1405 = vand.u32 %v494, 4294901760
    %1406 = vmatmul.mubr.f32.gmra.mrb[0].mxu0 %v1405
    %v1407 = vpop.f32.mrb[0].mxu0
    %v1408 = vadd.f32 %v1219, %v1407
    %v1409 = vpop.f32.mrb[0].mxu0
    %1410 = vmatprep.mubr.f32.mxu0 0.0
    %v1411 = vand.u32 %v497, 4294901760
    %1412 = vmatmul.mubr.f32.gmra.mrb[0].mxu0 %v1411
    %v1413 = vpop.f32.mrb[0].mxu0
    %v1414 = vadd.f32 %v1227, %v1413
    %v1415 = vpop.f32.mrb[0].mxu0
    %1416 = vmatprep.mubr.f32.mxu0 0.0
    %v1417 = vand.u32 %v500, 4294901760
    %1418 = vmatmul.mubr.f32.gmra.mrb[0].mxu0 %v1417
    %v1419 = vpop.f32.mrb[0].mxu0
    %v1420 = vadd.f32 %v1235, %v1419
    %v1421 = vpop.f32.mrb[0].mxu0
    %1422 = vmatprep.mubr.f32.mxu0 0.0
    %v1423 = vand.u32 %v503, 4294901760
    %1424 = vmatmul.mubr.f32.gmra.mrb[0].mxu0 %v1423
    %v1425 = vpop.f32.mrb[0].mxu0
    %v1426 = vadd.f32 %v1243, %v1425
    %v1427 = vpop.f32.mrb[0].mxu0
    %1428 = vmatprep.mubr.f32.mxu0 0.0
    %v1429 = vand.u32 %v506, 4294901760
    %1430 = vmatmul.mubr.f32.gmra.mrb[0].mxu0 %v1429
    %v1431 = vpop.f32.mrb[0].mxu0
    %v1432 = vadd.f32 %v1251, %v1431
    %v1433 = vpop.f32.mrb[0].mxu0
    %1434 = vmatprep.mubr.f32.mxu0 0.0
    %v1435 = vand.u32 %v509, 4294901760
    %1436 = vmatmul.mubr.f32.gmra.mrb[0].mxu0 %v1435
    %v1437 = vpop.f32.mrb[0].mxu0
    %v1438 = vadd.f32 %v1259, %v1437
    %v1439 = vpop.f32.mrb[0].mxu0
    %1440 = vmatprep.mubr.f32.mxu0 0.0
    %v1441 = vand.u32 %v512, 4294901760
    %1442 = vmatmul.mubr.f32.gmra.mrb[0].mxu0 %v1441
    %v1443 = vpop.f32.mrb[0].mxu0
    %v1444 = vadd.f32 %v1267, %v1443
    %v1445 = vpop.f32.mrb[0].mxu0
    %1446 = vmatprep.mubr.f32.mxu0 0.0
    %v1447 = vand.u32 %v515, 4294901760
    %1448 = vmatmul.mubr.f32.gmra.mrb[0].mxu0 %v1447
    %v1449 = vpop.f32.mrb[0].mxu0
    %v1450 = vadd.f32 %v1275, %v1449
    %v1451 = vpop.f32.mrb[0].mxu0
    %1452 = vmatprep.mubr.f32.mxu0 0.0
    %v1453 = vand.u32 %v518, 4294901760
    %1454 = vmatmul.mubr.f32.gmra.mrb[0].mxu0 %v1453
    %v1455 = vpop.f32.mrb[0].mxu0
    %v1456 = vadd.f32 %v1283, %v1455
    %v1457 = vpop.f32.mrb[0].mxu0
    %1458 = vmatprep.mubr.f32.mxu0 0.0
    %v1459 = vand.u32 %v521, 4294901760
    %1460 = vmatmul.mubr.f32.gmra.mrb[0].mxu0 %v1459
    %v1461 = vpop.f32.mrb[0].mxu0
    %v1462 = vadd.f32 %v1291, %v1461
    %v1463 = vpop.f32.mrb[0].mxu0
    %1464 = vmatprep.mubr.f32.mxu0 0.0
    %v1465 = vand.u32 %v524, 4294901760
    %1466 = vmatmul.mubr.f32.gmra.mrb[0].mxu0 %v1465
    %v1467 = vpop.f32.mrb[0].mxu0
    %v1468 = vadd.f32 %v1299, %v1467
    %v1469 = vpop.f32.mrb[0].mxu0
    %1470 = vdwg.mxu0
    %1471 = vmatprep.subr.mxu0 0.0
    %1472 = vmatpush1.msra.mxu0 %v312
    %1473 = vmatprep.subr.mxu0 0.0
    %1474 = vmatpush1.msra.mxu0 %v313
    %1475 = vmatprep.subr.mxu0 0.0
    %1476 = vmatpush1.msra.mxu0 %v314
    %1477 = vmatprep.subr.mxu0 0.0
    %1478 = vmatpush1.msra.mxu0 %v315
    %1479 = vmatprep.subr.mxu0 0.0
    %1480 = vmatpush1.msra.mxu0 0.0
    %1481 = vmatprep.subr.mxu0 0.0
    %1482 = vmatpush1.msra.mxu0 0.0
    %1483 = vmatprep.subr.mxu0 0.0
    %1484 = vmatpush1.msra.mxu0 0.0
    %1485 = vmatprep.subr.mxu0 0.0
    %1486 = vmatpush1.msra.mxu0 0.0
    %1487 = vmatprep.subr.mxu0 0.0
    %1488 = vmatpush1.msra.mxu0 0.0
    %1489 = vmatprep.subr.mxu0 0.0
    %1490 = vmatpush1.msra.mxu0 0.0
    %1491 = vmatprep.subr.mxu0 0.0
    %1492 = vmatpush1.msra.mxu0 0.0
    %1493 = vmatprep.subr.mxu0 0.0
    %1494 = vmatpush1.msra.mxu0 0.0
    %1495 = vmatprep.subr.mxu0 0.0
    %1496 = vmatpush1.msra.mxu0 0.0
    %1497 = vmatprep.subr.mxu0 0.0
    %1498 = vmatpush1.msra.mxu0 0.0
    %1499 = vmatprep.subr.mxu0 0.0
    %1500 = vmatpush1.msra.mxu0 0.0
    %1501 = vmatprep.subr.mxu0 0.0
    %1502 = vmatpush1.msra.mxu0 0.0
    %1503 = vmatprep.subr.mxu0 0.0
    %1504 = vmatpush1.msra.mxu0 0.0
    %1505 = vmatprep.subr.mxu0 0.0
    %1506 = vmatpush1.msra.mxu0 0.0
    %1507 = vmatprep.subr.mxu0 0.0
    %1508 = vmatpush1.msra.mxu0 0.0
    %1509 = vmatprep.subr.mxu0 0.0
    %1510 = vmatpush1.msra.mxu0 0.0
    %1511 = vmatprep.subr.mxu0 0.0
    %1512 = vmatpush1.msra.mxu0 0.0
    %1513 = vmatprep.subr.mxu0 0.0
    %1514 = vmatpush1.msra.mxu0 0.0
    %1515 = vmatprep.subr.mxu0 0.0
    %1516 = vmatpush1.msra.mxu0 0.0
    %1517 = vmatprep.subr.mxu0 0.0
    %1518 = vmatpush1.msra.mxu0 0.0
    %1519 = vmatprep.subr.mxu0 0.0
    %1520 = vmatpush1.msra.mxu0 0.0
    %1521 = vmatprep.subr.mxu0 0.0
    %1522 = vmatpush1.msra.mxu0 0.0
    %1523 = vmatprep.subr.mxu0 0.0
    %1524 = vmatpush1.msra.mxu0 0.0
    %1525 = vmatprep.subr.mxu0 0.0
    %1526 = vmatpush1.msra.mxu0 0.0
    %1527 = vmatprep.subr.mxu0 0.0
    %1528 = vmatpush1.msra.mxu0 0.0
    %1529 = vmatprep.subr.mxu0 0.0
    %1530 = vmatpush1.msra.mxu0 0.0
    %1531 = vmatprep.subr.mxu0 0.0
    %1532 = vmatpush1.msra.mxu0 0.0
    %1533 = vmatprep.subr.mxu0 0.0
    %1534 = vmatpush1.msra.mxu0 0.0
    %1535 = vmatprep.mubr.f32.mxu0 0.0
    %v1536 = vand.u32 %v479, 4294901760
    %1537 = vmatmul.mubr.f32.gmra.mrb[0].mxu0 %v1536
    %v1538 = vpop.f32.mrb[0].mxu0
    %v1539 = vadd.f32 %v1378, %v1538
    %v1540 = vpop.f32.mrb[0].mxu0
    %1541 = vmatprep.mubr.f32.mxu0 0.0
    %v1542 = vand.u32 %v482, 4294901760
    %1543 = vmatmul.mubr.f32.gmra.mrb[0].mxu0 %v1542
    %v1544 = vpop.f32.mrb[0].mxu0
    %v1545 = vadd.f32 %v1384, %v1544
    %v1546 = vpop.f32.mrb[0].mxu0
    %1547 = vmatprep.mubr.f32.mxu0 0.0
    %v1548 = vand.u32 %v485, 4294901760
    %1549 = vmatmul.mubr.f32.gmra.mrb[0].mxu0 %v1548
    %v1550 = vpop.f32.mrb[0].mxu0
    %v1551 = vadd.f32 %v1390, %v1550
    %v1552 = vpop.f32.mrb[0].mxu0
    %1553 = vmatprep.mubr.f32.mxu0 0.0
    %v1554 = vand.u32 %v488, 4294901760
    %1555 = vmatmul.mubr.f32.gmra.mrb[0].mxu0 %v1554
    %v1556 = vpop.f32.mrb[0].mxu0
    %v1557 = vadd.f32 %v1396, %v1556
    %v1558 = vpop.f32.mrb[0].mxu0
    %1559 = vmatprep.mubr.f32.mxu0 0.0
    %v1560 = vand.u32 %v491, 4294901760
    %1561 = vmatmul.mubr.f32.gmra.mrb[0].mxu0 %v1560
    %v1562 = vpop.f32.mrb[0].mxu0
    %v1563 = vadd.f32 %v1402, %v1562
    %v1564 = vpop.f32.mrb[0].mxu0
    %1565 = vmatprep.mubr.f32.mxu0 0.0
    %v1566 = vand.u32 %v494, 4294901760
    %1567 = vmatmul.mubr.f32.gmra.mrb[0].mxu0 %v1566
    %v1568 = vpop.f32.mrb[0].mxu0
    %v1569 = vadd.f32 %v1408, %v1568
    %v1570 = vpop.f32.mrb[0].mxu0
    %1571 = vmatprep.mubr.f32.mxu0 0.0
    %v1572 = vand.u32 %v497, 4294901760
    %1573 = vmatmul.mubr.f32.gmra.mrb[0].mxu0 %v1572
    %v1574 = vpop.f32.mrb[0].mxu0
    %v1575 = vadd.f32 %v1414, %v1574
    %v1576 = vpop.f32.mrb[0].mxu0
    %1577 = vmatprep.mubr.f32.mxu0 0.0
    %v1578 = vand.u32 %v500, 4294901760
    %1579 = vmatmul.mubr.f32.gmra.mrb[0].mxu0 %v1578
    %v1580 = vpop.f32.mrb[0].mxu0
    %v1581 = vadd.f32 %v1420, %v1580
    %v1582 = vpop.f32.mrb[0].mxu0
    %1583 = vmatprep.mubr.f32.mxu0 0.0
    %v1584 = vand.u32 %v503, 4294901760
    %1585 = vmatmul.mubr.f32.gmra.mrb[0].mxu0 %v1584
    %v1586 = vpop.f32.mrb[0].mxu0
    %v1587 = vadd.f32 %v1426, %v1586
    %v1588 = vpop.f32.mrb[0].mxu0
    %1589 = vmatprep.mubr.f32.mxu0 0.0
    %v1590 = vand.u32 %v506, 4294901760
    %1591 = vmatmul.mubr.f32.gmra.mrb[0].mxu0 %v1590
    %v1592 = vpop.f32.mrb[0].mxu0
    %v1593 = vadd.f32 %v1432, %v1592
    %v1594 = vpop.f32.mrb[0].mxu0
    %1595 = vmatprep.mubr.f32.mxu0 0.0
    %v1596 = vand.u32 %v509, 4294901760
    %1597 = vmatmul.mubr.f32.gmra.mrb[0].mxu0 %v1596
    %v1598 = vpop.f32.mrb[0].mxu0
    %v1599 = vadd.f32 %v1438, %v1598
    %v1600 = vpop.f32.mrb[0].mxu0
    %1601 = vmatprep.mubr.f32.mxu0 0.0
    %v1602 = vand.u32 %v512, 4294901760
    %1603 = vmatmul.mubr.f32.gmra.mrb[0].mxu0 %v1602
    %v1604 = vpop.f32.mrb[0].mxu0
    %v1605 = vadd.f32 %v1444, %v1604
    %v1606 = vpop.f32.mrb[0].mxu0
    %1607 = vmatprep.mubr.f32.mxu0 0.0
    %v1608 = vand.u32 %v515, 4294901760
    %1609 = vmatmul.mubr.f32.gmra.mrb[0].mxu0 %v1608
    %v1610 = vpop.f32.mrb[0].mxu0
    %v1611 = vadd.f32 %v1450, %v1610
    %v1612 = vpop.f32.mrb[0].mxu0
    %1613 = vmatprep.mubr.f32.mxu0 0.0
    %v1614 = vand.u32 %v518, 4294901760
    %1615 = vmatmul.mubr.f32.gmra.mrb[0].mxu0 %v1614
    %v1616 = vpop.f32.mrb[0].mxu0
    %v1617 = vadd.f32 %v1456, %v1616
    %v1618 = vpop.f32.mrb[0].mxu0
    %1619 = vmatprep.mubr.f32.mxu0 0.0
    %v1620 = vand.u32 %v521, 4294901760
    %1621 = vmatmul.mubr.f32.gmra.mrb[0].mxu0 %v1620
    %v1622 = vpop.f32.mrb[0].mxu0
    %v1623 = vadd.f32 %v1462, %v1622
    %v1624 = vpop.f32.mrb[0].mxu0
    %1625 = vmatprep.mubr.f32.mxu0 0.0
    %v1626 = vand.u32 %v524, 4294901760
    %1627 = vmatmul.mubr.f32.gmra.mrb[0].mxu0 %v1626
    %v1628 = vpop.f32.mrb[0].mxu0
    %v1629 = vadd.f32 %v1468, %v1628
    %v1630 = vpop.f32.mrb[0].mxu0
    %1631 = vdwg.mxu0
    %v1633 = vsel %vm477, %v461, 0
    %v1636 = vsel %vm477, %v462, 0
    %v1639 = vsel %vm477, %v463, 0
    %v1642 = vsel %vm477, %v464, 0
    %v1645 = vsel %vm477, %v465, 0
    %v1648 = vsel %vm477, %v466, 0
    %v1651 = vsel %vm477, %v467, 0
    %v1654 = vsel %vm477, %v468, 0
    %v1657 = vsel %vm477, %v469, 0
    %v1660 = vsel %vm477, %v470, 0
    %v1663 = vsel %vm477, %v471, 0
    %v1666 = vsel %vm477, %v472, 0
    %v1669 = vsel %vm477, %v473, 0
    %v1672 = vsel %vm477, %v474, 0
    %v1675 = vsel %vm477, %v475, 0
    %v1678 = vsel %vm477, %v476, 0
    %1680 = vmatprep.subr.mxu0 0.0
    %1681 = vmatpush1.msra.mxu0 %v312
    %1682 = vmatprep.subr.mxu0 0.0
    %1683 = vmatpush1.msra.mxu0 %v313
    %1684 = vmatprep.subr.mxu0 0.0
    %1685 = vmatpush1.msra.mxu0 %v314
    %1686 = vmatprep.subr.mxu0 0.0
    %1687 = vmatpush1.msra.mxu0 %v315
    %1688 = vmatprep.subr.mxu0 0.0
    %1689 = vmatpush1.msra.mxu0 0.0
    %1690 = vmatprep.subr.mxu0 0.0
    %1691 = vmatpush1.msra.mxu0 0.0
    %1692 = vmatprep.subr.mxu0 0.0
    %1693 = vmatpush1.msra.mxu0 0.0
    %1694 = vmatprep.subr.mxu0 0.0
    %1695 = vmatpush1.msra.mxu0 0.0
    %1696 = vmatprep.subr.mxu0 0.0
    %1697 = vmatpush1.msra.mxu0 0.0
    %1698 = vmatprep.subr.mxu0 0.0
    %1699 = vmatpush1.msra.mxu0 0.0
    %1700 = vmatprep.subr.mxu0 0.0
    %1701 = vmatpush1.msra.mxu0 0.0
    %1702 = vmatprep.subr.mxu0 0.0
    %1703 = vmatpush1.msra.mxu0 0.0
    %1704 = vmatprep.subr.mxu0 0.0
    %1705 = vmatpush1.msra.mxu0 0.0
    %1706 = vmatprep.subr.mxu0 0.0
    %1707 = vmatpush1.msra.mxu0 0.0
    %1708 = vmatprep.subr.mxu0 0.0
    %1709 = vmatpush1.msra.mxu0 0.0
    %1710 = vmatprep.subr.mxu0 0.0
    %1711 = vmatpush1.msra.mxu0 0.0
    %1712 = vmatprep.subr.mxu0 0.0
    %1713 = vmatpush1.msra.mxu0 0.0
    %1714 = vmatprep.subr.mxu0 0.0
    %1715 = vmatpush1.msra.mxu0 0.0
    %1716 = vmatprep.subr.mxu0 0.0
    %1717 = vmatpush1.msra.mxu0 0.0
    %1718 = vmatprep.subr.mxu0 0.0
    %1719 = vmatpush1.msra.mxu0 0.0
    %1720 = vmatprep.subr.mxu0 0.0
    %1721 = vmatpush1.msra.mxu0 0.0
    %1722 = vmatprep.subr.mxu0 0.0
    %1723 = vmatpush1.msra.mxu0 0.0
    %1724 = vmatprep.subr.mxu0 0.0
    %1725 = vmatpush1.msra.mxu0 0.0
    %1726 = vmatprep.subr.mxu0 0.0
    %1727 = vmatpush1.msra.mxu0 0.0
    %1728 = vmatprep.subr.mxu0 0.0
    %1729 = vmatpush1.msra.mxu0 0.0
    %1730 = vmatprep.subr.mxu0 0.0
    %1731 = vmatpush1.msra.mxu0 0.0
    %1732 = vmatprep.subr.mxu0 0.0
    %1733 = vmatpush1.msra.mxu0 0.0
    %1734 = vmatprep.subr.mxu0 0.0
    %1735 = vmatpush1.msra.mxu0 0.0
    %1736 = vmatprep.subr.mxu0 0.0
    %1737 = vmatpush1.msra.mxu0 0.0
    %1738 = vmatprep.subr.mxu0 0.0
    %1739 = vmatpush1.msra.mxu0 0.0
    %1740 = vmatprep.subr.mxu0 0.0
    %1741 = vmatpush1.msra.mxu0 0.0
    %1742 = vmatprep.subr.mxu0 0.0
    %1743 = vmatpush1.msra.mxu0 0.0
    %1744 = vmatprep.mubr.f32.mxu0 0.0
    %v1745 = vand.u32 %v1633, 4294901760
    %v1746 = vsub.f32 %v1633, %v1745
    %v1747 = vand.u32 %v1746, 4294901760
    %v1748 = vsub.f32 %v1746, %v1747
    %v1749 = vand.u32 %v1748, 4294901760
    %1750 = vmatmul.mubr.f32.gmra.mrb[0].mxu0 %v1749
    %v1751 = vpop.f32.mrb[0].mxu0
    %v1752 = vadd.f32 0.0, %v1751
    %v1753 = vpop.f32.mrb[0].mxu0
    %1754 = vmatprep.mubr.f32.mxu0 0.0
    %v1755 = vand.u32 %v1636, 4294901760
    %v1756 = vsub.f32 %v1636, %v1755
    %v1757 = vand.u32 %v1756, 4294901760
    %v1758 = vsub.f32 %v1756, %v1757
    %v1759 = vand.u32 %v1758, 4294901760
    %1760 = vmatmul.mubr.f32.gmra.mrb[0].mxu0 %v1759
    %v1761 = vpop.f32.mrb[0].mxu0
    %v1762 = vadd.f32 0.0, %v1761
    %v1763 = vpop.f32.mrb[0].mxu0
    %1764 = vmatprep.mubr.f32.mxu0 0.0
    %v1765 = vand.u32 %v1639, 4294901760
    %v1766 = vsub.f32 %v1639, %v1765
    %v1767 = vand.u32 %v1766, 4294901760
    %v1768 = vsub.f32 %v1766, %v1767
    %v1769 = vand.u32 %v1768, 4294901760
    %1770 = vmatmul.mubr.f32.gmra.mrb[0].mxu0 %v1769
    %v1771 = vpop.f32.mrb[0].mxu0
    %v1772 = vadd.f32 0.0, %v1771
    %v1773 = vpop.f32.mrb[0].mxu0
    %1774 = vmatprep.mubr.f32.mxu0 0.0
    %v1775 = vand.u32 %v1642, 4294901760
    %v1776 = vsub.f32 %v1642, %v1775
    %v1777 = vand.u32 %v1776, 4294901760
    %v1778 = vsub.f32 %v1776, %v1777
    %v1779 = vand.u32 %v1778, 4294901760
    %1780 = vmatmul.mubr.f32.gmra.mrb[0].mxu0 %v1779
    %v1781 = vpop.f32.mrb[0].mxu0
    %v1782 = vadd.f32 0.0, %v1781
    %v1783 = vpop.f32.mrb[0].mxu0
    %1784 = vmatprep.mubr.f32.mxu0 0.0
    %v1785 = vand.u32 %v1645, 4294901760
    %v1786 = vsub.f32 %v1645, %v1785
    %v1787 = vand.u32 %v1786, 4294901760
    %v1788 = vsub.f32 %v1786, %v1787
    %v1789 = vand.u32 %v1788, 4294901760
    %1790 = vmatmul.mubr.f32.gmra.mrb[0].mxu0 %v1789
    %v1791 = vpop.f32.mrb[0].mxu0
    %v1792 = vadd.f32 0.0, %v1791
    %v1793 = vpop.f32.mrb[0].mxu0
    %1794 = vmatprep.mubr.f32.mxu0 0.0
    %v1795 = vand.u32 %v1648, 4294901760
    %v1796 = vsub.f32 %v1648, %v1795
    %v1797 = vand.u32 %v1796, 4294901760
    %v1798 = vsub.f32 %v1796, %v1797
    %v1799 = vand.u32 %v1798, 4294901760
    %1800 = vmatmul.mubr.f32.gmra.mrb[0].mxu0 %v1799
    %v1801 = vpop.f32.mrb[0].mxu0
    %v1802 = vadd.f32 0.0, %v1801
    %v1803 = vpop.f32.mrb[0].mxu0
    %1804 = vmatprep.mubr.f32.mxu0 0.0
    %v1805 = vand.u32 %v1651, 4294901760
    %v1806 = vsub.f32 %v1651, %v1805
    %v1807 = vand.u32 %v1806, 4294901760
    %v1808 = vsub.f32 %v1806, %v1807
    %v1809 = vand.u32 %v1808, 4294901760
    %1810 = vmatmul.mubr.f32.gmra.mrb[0].mxu0 %v1809
    %v1811 = vpop.f32.mrb[0].mxu0
    %v1812 = vadd.f32 0.0, %v1811
    %v1813 = vpop.f32.mrb[0].mxu0
    %1814 = vmatprep.mubr.f32.mxu0 0.0
    %v1815 = vand.u32 %v1654, 4294901760
    %v1816 = vsub.f32 %v1654, %v1815
    %v1817 = vand.u32 %v1816, 4294901760
    %v1818 = vsub.f32 %v1816, %v1817
    %v1819 = vand.u32 %v1818, 4294901760
    %1820 = vmatmul.mubr.f32.gmra.mrb[0].mxu0 %v1819
    %v1821 = vpop.f32.mrb[0].mxu0
    %v1822 = vadd.f32 0.0, %v1821
    %v1823 = vpop.f32.mrb[0].mxu0
    %1824 = vmatprep.mubr.f32.mxu0 0.0
    %v1825 = vand.u32 %v1657, 4294901760
    %v1826 = vsub.f32 %v1657, %v1825
    %v1827 = vand.u32 %v1826, 4294901760
    %v1828 = vsub.f32 %v1826, %v1827
    %v1829 = vand.u32 %v1828, 4294901760
    %1830 = vmatmul.mubr.f32.gmra.mrb[0].mxu0 %v1829
    %v1831 = vpop.f32.mrb[0].mxu0
    %v1832 = vadd.f32 0.0, %v1831
    %v1833 = vpop.f32.mrb[0].mxu0
    %1834 = vmatprep.mubr.f32.mxu0 0.0
    %v1835 = vand.u32 %v1660, 4294901760
    %v1836 = vsub.f32 %v1660, %v1835
    %v1837 = vand.u32 %v1836, 4294901760
    %v1838 = vsub.f32 %v1836, %v1837
    %v1839 = vand.u32 %v1838, 4294901760
    %1840 = vmatmul.mubr.f32.gmra.mrb[0].mxu0 %v1839
    %v1841 = vpop.f32.mrb[0].mxu0
    %v1842 = vadd.f32 0.0, %v1841
    %v1843 = vpop.f32.mrb[0].mxu0
    %1844 = vmatprep.mubr.f32.mxu0 0.0
    %v1845 = vand.u32 %v1663, 4294901760
    %v1846 = vsub.f32 %v1663, %v1845
    %v1847 = vand.u32 %v1846, 4294901760
    %v1848 = vsub.f32 %v1846, %v1847
    %v1849 = vand.u32 %v1848, 4294901760
    %1850 = vmatmul.mubr.f32.gmra.mrb[0].mxu0 %v1849
    %v1851 = vpop.f32.mrb[0].mxu0
    %v1852 = vadd.f32 0.0, %v1851
    %v1853 = vpop.f32.mrb[0].mxu0
    %1854 = vmatprep.mubr.f32.mxu0 0.0
    %v1855 = vand.u32 %v1666, 4294901760
    %v1856 = vsub.f32 %v1666, %v1855
    %v1857 = vand.u32 %v1856, 4294901760
    %v1858 = vsub.f32 %v1856, %v1857
    %v1859 = vand.u32 %v1858, 4294901760
    %1860 = vmatmul.mubr.f32.gmra.mrb[0].mxu0 %v1859
    %v1861 = vpop.f32.mrb[0].mxu0
    %v1862 = vadd.f32 0.0, %v1861
    %v1863 = vpop.f32.mrb[0].mxu0
    %1864 = vmatprep.mubr.f32.mxu0 0.0
    %v1865 = vand.u32 %v1669, 4294901760
    %v1866 = vsub.f32 %v1669, %v1865
    %v1867 = vand.u32 %v1866, 4294901760
    %v1868 = vsub.f32 %v1866, %v1867
    %v1869 = vand.u32 %v1868, 4294901760
    %1870 = vmatmul.mubr.f32.gmra.mrb[0].mxu0 %v1869
    %v1871 = vpop.f32.mrb[0].mxu0
    %v1872 = vadd.f32 0.0, %v1871
    %v1873 = vpop.f32.mrb[0].mxu0
    %1874 = vmatprep.mubr.f32.mxu0 0.0
    %v1875 = vand.u32 %v1672, 4294901760
    %v1876 = vsub.f32 %v1672, %v1875
    %v1877 = vand.u32 %v1876, 4294901760
    %v1878 = vsub.f32 %v1876, %v1877
    %v1879 = vand.u32 %v1878, 4294901760
    %1880 = vmatmul.mubr.f32.gmra.mrb[0].mxu0 %v1879
    %v1881 = vpop.f32.mrb[0].mxu0
    %v1882 = vadd.f32 0.0, %v1881
    %v1883 = vpop.f32.mrb[0].mxu0
    %1884 = vmatprep.mubr.f32.mxu0 0.0
    %v1885 = vand.u32 %v1675, 4294901760
    %v1886 = vsub.f32 %v1675, %v1885
    %v1887 = vand.u32 %v1886, 4294901760
    %v1888 = vsub.f32 %v1886, %v1887
    %v1889 = vand.u32 %v1888, 4294901760
    %1890 = vmatmul.mubr.f32.gmra.mrb[0].mxu0 %v1889
    %v1891 = vpop.f32.mrb[0].mxu0
    %v1892 = vadd.f32 0.0, %v1891
    %v1893 = vpop.f32.mrb[0].mxu0
    %1894 = vmatprep.mubr.f32.mxu0 0.0
    %v1895 = vand.u32 %v1678, 4294901760
    %v1896 = vsub.f32 %v1678, %v1895
    %v1897 = vand.u32 %v1896, 4294901760
    %v1898 = vsub.f32 %v1896, %v1897
    %v1899 = vand.u32 %v1898, 4294901760
    %1900 = vmatmul.mubr.f32.gmra.mrb[0].mxu0 %v1899
    %v1901 = vpop.f32.mrb[0].mxu0
    %v1902 = vadd.f32 0.0, %v1901
    %v1903 = vpop.f32.mrb[0].mxu0
    %1904 = vdwg.mxu0
    %1905 = vmatprep.subr.mxu0 0.0
    %v1906 = vsub.f32 %v312, %v312
    %v1907 = vand.u32 %v1906, 4294901760
    %v1908 = vsub.f32 %v1906, %v1907
    %v1909 = vand.u32 %v1908, 4294901760
    %1910 = vmatpush1.msra.mxu0 %v1909
    %1911 = vmatprep.subr.mxu0 0.0
    %v1912 = vsub.f32 %v313, %v313
    %v1913 = vand.u32 %v1912, 4294901760
    %v1914 = vsub.f32 %v1912, %v1913
    %v1915 = vand.u32 %v1914, 4294901760
    %1916 = vmatpush1.msra.mxu0 %v1915
    %1917 = vmatprep.subr.mxu0 0.0
    %v1918 = vsub.f32 %v314, %v314
    %v1919 = vand.u32 %v1918, 4294901760
    %v1920 = vsub.f32 %v1918, %v1919
    %v1921 = vand.u32 %v1920, 4294901760
    %1922 = vmatpush1.msra.mxu0 %v1921
    %1923 = vmatprep.subr.mxu0 0.0
    %v1924 = vsub.f32 %v315, %v315
    %v1925 = vand.u32 %v1924, 4294901760
    %v1926 = vsub.f32 %v1924, %v1925
    %v1927 = vand.u32 %v1926, 4294901760
    %1928 = vmatpush1.msra.mxu0 %v1927
    %1929 = vmatprep.subr.mxu0 0.0
    %1930 = vmatpush1.msra.mxu0 0.0
    %1931 = vmatprep.subr.mxu0 0.0
    %1932 = vmatpush1.msra.mxu0 0.0
    %1933 = vmatprep.subr.mxu0 0.0
    %1934 = vmatpush1.msra.mxu0 0.0
    %1935 = vmatprep.subr.mxu0 0.0
    %1936 = vmatpush1.msra.mxu0 0.0
    %1937 = vmatprep.subr.mxu0 0.0
    %1938 = vmatpush1.msra.mxu0 0.0
    %1939 = vmatprep.subr.mxu0 0.0
    %1940 = vmatpush1.msra.mxu0 0.0
    %1941 = vmatprep.subr.mxu0 0.0
    %1942 = vmatpush1.msra.mxu0 0.0
    %1943 = vmatprep.subr.mxu0 0.0
    %1944 = vmatpush1.msra.mxu0 0.0
    %1945 = vmatprep.subr.mxu0 0.0
    %1946 = vmatpush1.msra.mxu0 0.0
    %1947 = vmatprep.subr.mxu0 0.0
    %1948 = vmatpush1.msra.mxu0 0.0
    %1949 = vmatprep.subr.mxu0 0.0
    %1950 = vmatpush1.msra.mxu0 0.0
    %1951 = vmatprep.subr.mxu0 0.0
    %1952 = vmatpush1.msra.mxu0 0.0
    %1953 = vmatprep.subr.mxu0 0.0
    %1954 = vmatpush1.msra.mxu0 0.0
    %1955 = vmatprep.subr.mxu0 0.0
    %1956 = vmatpush1.msra.mxu0 0.0
    %1957 = vmatprep.subr.mxu0 0.0
    %1958 = vmatpush1.msra.mxu0 0.0
    %1959 = vmatprep.subr.mxu0 0.0
    %1960 = vmatpush1.msra.mxu0 0.0
    %1961 = vmatprep.subr.mxu0 0.0
    %1962 = vmatpush1.msra.mxu0 0.0
    %1963 = vmatprep.subr.mxu0 0.0
    %1964 = vmatpush1.msra.mxu0 0.0
    %1965 = vmatprep.subr.mxu0 0.0
    %1966 = vmatpush1.msra.mxu0 0.0
    %1967 = vmatprep.subr.mxu0 0.0
    %1968 = vmatpush1.msra.mxu0 0.0
    %1969 = vmatprep.subr.mxu0 0.0
    %1970 = vmatpush1.msra.mxu0 0.0
    %1971 = vmatprep.subr.mxu0 0.0
    %1972 = vmatpush1.msra.mxu0 0.0
    %1973 = vmatprep.subr.mxu0 0.0
    %1974 = vmatpush1.msra.mxu0 0.0
    %1975 = vmatprep.subr.mxu0 0.0
    %1976 = vmatpush1.msra.mxu0 0.0
    %1977 = vmatprep.subr.mxu0 0.0
    %1978 = vmatpush1.msra.mxu0 0.0
    %1979 = vmatprep.subr.mxu0 0.0
    %1980 = vmatpush1.msra.mxu0 0.0
    %1981 = vmatprep.subr.mxu0 0.0
    %1982 = vmatpush1.msra.mxu0 0.0
    %1983 = vmatprep.subr.mxu0 0.0
    %1984 = vmatpush1.msra.mxu0 0.0
    %1985 = vmatprep.mubr.f32.mxu0 0.0
    %v1986 = vand.u32 %v1633, 4294901760
    %1987 = vmatmul.mubr.f32.gmra.mrb[0].mxu0 %v1986
    %v1988 = vpop.f32.mrb[0].mxu0
    %v1989 = vadd.f32 %v1752, %v1988
    %v1990 = vpop.f32.mrb[0].mxu0
    %1991 = vmatprep.mubr.f32.mxu0 0.0
    %v1992 = vand.u32 %v1636, 4294901760
    %1993 = vmatmul.mubr.f32.gmra.mrb[0].mxu0 %v1992
    %v1994 = vpop.f32.mrb[0].mxu0
    %v1995 = vadd.f32 %v1762, %v1994
    %v1996 = vpop.f32.mrb[0].mxu0
    %1997 = vmatprep.mubr.f32.mxu0 0.0
    %v1998 = vand.u32 %v1639, 4294901760
    %1999 = vmatmul.mubr.f32.gmra.mrb[0].mxu0 %v1998
    %v2000 = vpop.f32.mrb[0].mxu0
    %v2001 = vadd.f32 %v1772, %v2000
    %v2002 = vpop.f32.mrb[0].mxu0
    %2003 = vmatprep.mubr.f32.mxu0 0.0
    %v2004 = vand.u32 %v1642, 4294901760
    %2005 = vmatmul.mubr.f32.gmra.mrb[0].mxu0 %v2004
    %v2006 = vpop.f32.mrb[0].mxu0
    %v2007 = vadd.f32 %v1782, %v2006
    %v2008 = vpop.f32.mrb[0].mxu0
    %2009 = vmatprep.mubr.f32.mxu0 0.0
    %v2010 = vand.u32 %v1645, 4294901760
    %2011 = vmatmul.mubr.f32.gmra.mrb[0].mxu0 %v2010
    %v2012 = vpop.f32.mrb[0].mxu0
    %v2013 = vadd.f32 %v1792, %v2012
    %v2014 = vpop.f32.mrb[0].mxu0
    %2015 = vmatprep.mubr.f32.mxu0 0.0
    %v2016 = vand.u32 %v1648, 4294901760
    %2017 = vmatmul.mubr.f32.gmra.mrb[0].mxu0 %v2016
    %v2018 = vpop.f32.mrb[0].mxu0
    %v2019 = vadd.f32 %v1802, %v2018
    %v2020 = vpop.f32.mrb[0].mxu0
    %2021 = vmatprep.mubr.f32.mxu0 0.0
    %v2022 = vand.u32 %v1651, 4294901760
    %2023 = vmatmul.mubr.f32.gmra.mrb[0].mxu0 %v2022
    %v2024 = vpop.f32.mrb[0].mxu0
    %v2025 = vadd.f32 %v1812, %v2024
    %v2026 = vpop.f32.mrb[0].mxu0
    %2027 = vmatprep.mubr.f32.mxu0 0.0
    %v2028 = vand.u32 %v1654, 4294901760
    %2029 = vmatmul.mubr.f32.gmra.mrb[0].mxu0 %v2028
    %v2030 = vpop.f32.mrb[0].mxu0
    %v2031 = vadd.f32 %v1822, %v2030
    %v2032 = vpop.f32.mrb[0].mxu0
    %2033 = vmatprep.mubr.f32.mxu0 0.0
    %v2034 = vand.u32 %v1657, 4294901760
    %2035 = vmatmul.mubr.f32.gmra.mrb[0].mxu0 %v2034
    %v2036 = vpop.f32.mrb[0].mxu0
    %v2037 = vadd.f32 %v1832, %v2036
    %v2038 = vpop.f32.mrb[0].mxu0
    %2039 = vmatprep.mubr.f32.mxu0 0.0
    %v2040 = vand.u32 %v1660, 4294901760
    %2041 = vmatmul.mubr.f32.gmra.mrb[0].mxu0 %v2040
    %v2042 = vpop.f32.mrb[0].mxu0
    %v2043 = vadd.f32 %v1842, %v2042
    %v2044 = vpop.f32.mrb[0].mxu0
    %2045 = vmatprep.mubr.f32.mxu0 0.0
    %v2046 = vand.u32 %v1663, 4294901760
    %2047 = vmatmul.mubr.f32.gmra.mrb[0].mxu0 %v2046
    %v2048 = vpop.f32.mrb[0].mxu0
    %v2049 = vadd.f32 %v1852, %v2048
    %v2050 = vpop.f32.mrb[0].mxu0
    %2051 = vmatprep.mubr.f32.mxu0 0.0
    %v2052 = vand.u32 %v1666, 4294901760
    %2053 = vmatmul.mubr.f32.gmra.mrb[0].mxu0 %v2052
    %v2054 = vpop.f32.mrb[0].mxu0
    %v2055 = vadd.f32 %v1862, %v2054
    %v2056 = vpop.f32.mrb[0].mxu0
    %2057 = vmatprep.mubr.f32.mxu0 0.0
    %v2058 = vand.u32 %v1669, 4294901760
    %2059 = vmatmul.mubr.f32.gmra.mrb[0].mxu0 %v2058
    %v2060 = vpop.f32.mrb[0].mxu0
    %v2061 = vadd.f32 %v1872, %v2060
    %v2062 = vpop.f32.mrb[0].mxu0
    %2063 = vmatprep.mubr.f32.mxu0 0.0
    %v2064 = vand.u32 %v1672, 4294901760
    %2065 = vmatmul.mubr.f32.gmra.mrb[0].mxu0 %v2064
    %v2066 = vpop.f32.mrb[0].mxu0
    %v2067 = vadd.f32 %v1882, %v2066
    %v2068 = vpop.f32.mrb[0].mxu0
    %2069 = vmatprep.mubr.f32.mxu0 0.0
    %v2070 = vand.u32 %v1675, 4294901760
    %2071 = vmatmul.mubr.f32.gmra.mrb[0].mxu0 %v2070
    %v2072 = vpop.f32.mrb[0].mxu0
    %v2073 = vadd.f32 %v1892, %v2072
    %v2074 = vpop.f32.mrb[0].mxu0
    %2075 = vmatprep.mubr.f32.mxu0 0.0
    %v2076 = vand.u32 %v1678, 4294901760
    %2077 = vmatmul.mubr.f32.gmra.mrb[0].mxu0 %v2076
    %v2078 = vpop.f32.mrb[0].mxu0
    %v2079 = vadd.f32 %v1902, %v2078
    %v2080 = vpop.f32.mrb[0].mxu0
    %2081 = vdwg.mxu0
    %2082 = vmatprep.subr.mxu0 0.0
    %v2083 = vsub.f32 %v312, %v312
    %2084 = vmatpush1.msra.mxu0 %v2083
    %2085 = vmatprep.subr.mxu0 0.0
    %v2086 = vsub.f32 %v313, %v313
    %2087 = vmatpush1.msra.mxu0 %v2086
    %2088 = vmatprep.subr.mxu0 0.0
    %v2089 = vsub.f32 %v314, %v314
    %2090 = vmatpush1.msra.mxu0 %v2089
    %2091 = vmatprep.subr.mxu0 0.0
    %v2092 = vsub.f32 %v315, %v315
    %2093 = vmatpush1.msra.mxu0 %v2092
    %2094 = vmatprep.subr.mxu0 0.0
    %2095 = vmatpush1.msra.mxu0 0.0
    %2096 = vmatprep.subr.mxu0 0.0
    %2097 = vmatpush1.msra.mxu0 0.0
    %2098 = vmatprep.subr.mxu0 0.0
    %2099 = vmatpush1.msra.mxu0 0.0
    %2100 = vmatprep.subr.mxu0 0.0
    %2101 = vmatpush1.msra.mxu0 0.0
    %2102 = vmatprep.subr.mxu0 0.0
    %2103 = vmatpush1.msra.mxu0 0.0
    %2104 = vmatprep.subr.mxu0 0.0
    %2105 = vmatpush1.msra.mxu0 0.0
    %2106 = vmatprep.subr.mxu0 0.0
    %2107 = vmatpush1.msra.mxu0 0.0
    %2108 = vmatprep.subr.mxu0 0.0
    %2109 = vmatpush1.msra.mxu0 0.0
    %2110 = vmatprep.subr.mxu0 0.0
    %2111 = vmatpush1.msra.mxu0 0.0
    %2112 = vmatprep.subr.mxu0 0.0
    %2113 = vmatpush1.msra.mxu0 0.0
    %2114 = vmatprep.subr.mxu0 0.0
    %2115 = vmatpush1.msra.mxu0 0.0
    %2116 = vmatprep.subr.mxu0 0.0
    %2117 = vmatpush1.msra.mxu0 0.0
    %2118 = vmatprep.subr.mxu0 0.0
    %2119 = vmatpush1.msra.mxu0 0.0
    %2120 = vmatprep.subr.mxu0 0.0
    %2121 = vmatpush1.msra.mxu0 0.0
    %2122 = vmatprep.subr.mxu0 0.0
    %2123 = vmatpush1.msra.mxu0 0.0
    %2124 = vmatprep.subr.mxu0 0.0
    %2125 = vmatpush1.msra.mxu0 0.0
    %2126 = vmatprep.subr.mxu0 0.0
    %2127 = vmatpush1.msra.mxu0 0.0
    %2128 = vmatprep.subr.mxu0 0.0
    %2129 = vmatpush1.msra.mxu0 0.0
    %2130 = vmatprep.subr.mxu0 0.0
    %2131 = vmatpush1.msra.mxu0 0.0
    %2132 = vmatprep.subr.mxu0 0.0
    %2133 = vmatpush1.msra.mxu0 0.0
    %2134 = vmatprep.subr.mxu0 0.0
    %2135 = vmatpush1.msra.mxu0 0.0
    %2136 = vmatprep.subr.mxu0 0.0
    %2137 = vmatpush1.msra.mxu0 0.0
    %2138 = vmatprep.subr.mxu0 0.0
    %2139 = vmatpush1.msra.mxu0 0.0
    %2140 = vmatprep.subr.mxu0 0.0
    %2141 = vmatpush1.msra.mxu0 0.0
    %2142 = vmatprep.subr.mxu0 0.0
    %2143 = vmatpush1.msra.mxu0 0.0
    %2144 = vmatprep.subr.mxu0 0.0
    %2145 = vmatpush1.msra.mxu0 0.0
    %2146 = vmatprep.subr.mxu0 0.0
    %2147 = vmatpush1.msra.mxu0 0.0
    %2148 = vmatprep.subr.mxu0 0.0
    %2149 = vmatpush1.msra.mxu0 0.0
    %2150 = vmatprep.mubr.f32.mxu0 0.0
    %v2151 = vand.u32 %v1633, 4294901760
    %v2152 = vsub.f32 %v1633, %v2151
    %2153 = vmatmul.mubr.f32.gmra.mrb[0].mxu0 %v2152
    %v2154 = vpop.f32.mrb[0].mxu0
    %v2155 = vadd.f32 %v1989, %v2154
    %v2156 = vpop.f32.mrb[0].mxu0
    %2157 = vmatprep.mubr.f32.mxu0 0.0
    %v2158 = vand.u32 %v1636, 4294901760
    %v2159 = vsub.f32 %v1636, %v2158
    %2160 = vmatmul.mubr.f32.gmra.mrb[0].mxu0 %v2159
    %v2161 = vpop.f32.mrb[0].mxu0
    %v2162 = vadd.f32 %v1995, %v2161
    %v2163 = vpop.f32.mrb[0].mxu0
    %2164 = vmatprep.mubr.f32.mxu0 0.0
    %v2165 = vand.u32 %v1639, 4294901760
    %v2166 = vsub.f32 %v1639, %v2165
    %2167 = vmatmul.mubr.f32.gmra.mrb[0].mxu0 %v2166
    %v2168 = vpop.f32.mrb[0].mxu0
    %v2169 = vadd.f32 %v2001, %v2168
    %v2170 = vpop.f32.mrb[0].mxu0
    %2171 = vmatprep.mubr.f32.mxu0 0.0
    %v2172 = vand.u32 %v1642, 4294901760
    %v2173 = vsub.f32 %v1642, %v2172
    %2174 = vmatmul.mubr.f32.gmra.mrb[0].mxu0 %v2173
    %v2175 = vpop.f32.mrb[0].mxu0
    %v2176 = vadd.f32 %v2007, %v2175
    %v2177 = vpop.f32.mrb[0].mxu0
    %2178 = vmatprep.mubr.f32.mxu0 0.0
    %v2179 = vand.u32 %v1645, 4294901760
    %v2180 = vsub.f32 %v1645, %v2179
    %2181 = vmatmul.mubr.f32.gmra.mrb[0].mxu0 %v2180
    %v2182 = vpop.f32.mrb[0].mxu0
    %v2183 = vadd.f32 %v2013, %v2182
    %v2184 = vpop.f32.mrb[0].mxu0
    %2185 = vmatprep.mubr.f32.mxu0 0.0
    %v2186 = vand.u32 %v1648, 4294901760
    %v2187 = vsub.f32 %v1648, %v2186
    %2188 = vmatmul.mubr.f32.gmra.mrb[0].mxu0 %v2187
    %v2189 = vpop.f32.mrb[0].mxu0
    %v2190 = vadd.f32 %v2019, %v2189
    %v2191 = vpop.f32.mrb[0].mxu0
    %2192 = vmatprep.mubr.f32.mxu0 0.0
    %v2193 = vand.u32 %v1651, 4294901760
    %v2194 = vsub.f32 %v1651, %v2193
    %2195 = vmatmul.mubr.f32.gmra.mrb[0].mxu0 %v2194
    %v2196 = vpop.f32.mrb[0].mxu0
    %v2197 = vadd.f32 %v2025, %v2196
    %v2198 = vpop.f32.mrb[0].mxu0
    %2199 = vmatprep.mubr.f32.mxu0 0.0
    %v2200 = vand.u32 %v1654, 4294901760
    %v2201 = vsub.f32 %v1654, %v2200
    %2202 = vmatmul.mubr.f32.gmra.mrb[0].mxu0 %v2201
    %v2203 = vpop.f32.mrb[0].mxu0
    %v2204 = vadd.f32 %v2031, %v2203
    %v2205 = vpop.f32.mrb[0].mxu0
    %2206 = vmatprep.mubr.f32.mxu0 0.0
    %v2207 = vand.u32 %v1657, 4294901760
    %v2208 = vsub.f32 %v1657, %v2207
    %2209 = vmatmul.mubr.f32.gmra.mrb[0].mxu0 %v2208
    %v2210 = vpop.f32.mrb[0].mxu0
    %v2211 = vadd.f32 %v2037, %v2210
    %v2212 = vpop.f32.mrb[0].mxu0
    %2213 = vmatprep.mubr.f32.mxu0 0.0
    %v2214 = vand.u32 %v1660, 4294901760
    %v2215 = vsub.f32 %v1660, %v2214
    %2216 = vmatmul.mubr.f32.gmra.mrb[0].mxu0 %v2215
    %v2217 = vpop.f32.mrb[0].mxu0
    %v2218 = vadd.f32 %v2043, %v2217
    %v2219 = vpop.f32.mrb[0].mxu0
    %2220 = vmatprep.mubr.f32.mxu0 0.0
    %v2221 = vand.u32 %v1663, 4294901760
    %v2222 = vsub.f32 %v1663, %v2221
    %2223 = vmatmul.mubr.f32.gmra.mrb[0].mxu0 %v2222
    %v2224 = vpop.f32.mrb[0].mxu0
    %v2225 = vadd.f32 %v2049, %v2224
    %v2226 = vpop.f32.mrb[0].mxu0
    %2227 = vmatprep.mubr.f32.mxu0 0.0
    %v2228 = vand.u32 %v1666, 4294901760
    %v2229 = vsub.f32 %v1666, %v2228
    %2230 = vmatmul.mubr.f32.gmra.mrb[0].mxu0 %v2229
    %v2231 = vpop.f32.mrb[0].mxu0
    %v2232 = vadd.f32 %v2055, %v2231
    %v2233 = vpop.f32.mrb[0].mxu0
    %2234 = vmatprep.mubr.f32.mxu0 0.0
    %v2235 = vand.u32 %v1669, 4294901760
    %v2236 = vsub.f32 %v1669, %v2235
    %2237 = vmatmul.mubr.f32.gmra.mrb[0].mxu0 %v2236
    %v2238 = vpop.f32.mrb[0].mxu0
    %v2239 = vadd.f32 %v2061, %v2238
    %v2240 = vpop.f32.mrb[0].mxu0
    %2241 = vmatprep.mubr.f32.mxu0 0.0
    %v2242 = vand.u32 %v1672, 4294901760
    %v2243 = vsub.f32 %v1672, %v2242
    %2244 = vmatmul.mubr.f32.gmra.mrb[0].mxu0 %v2243
    %v2245 = vpop.f32.mrb[0].mxu0
    %v2246 = vadd.f32 %v2067, %v2245
    %v2247 = vpop.f32.mrb[0].mxu0
    %2248 = vmatprep.mubr.f32.mxu0 0.0
    %v2249 = vand.u32 %v1675, 4294901760
    %v2250 = vsub.f32 %v1675, %v2249
    %2251 = vmatmul.mubr.f32.gmra.mrb[0].mxu0 %v2250
    %v2252 = vpop.f32.mrb[0].mxu0
    %v2253 = vadd.f32 %v2073, %v2252
    %v2254 = vpop.f32.mrb[0].mxu0
    %2255 = vmatprep.mubr.f32.mxu0 0.0
    %v2256 = vand.u32 %v1678, 4294901760
    %v2257 = vsub.f32 %v1678, %v2256
    %2258 = vmatmul.mubr.f32.gmra.mrb[0].mxu0 %v2257
    %v2259 = vpop.f32.mrb[0].mxu0
    %v2260 = vadd.f32 %v2079, %v2259
    %v2261 = vpop.f32.mrb[0].mxu0
    %2262 = vdwg.mxu0
    %2263 = vmatprep.subr.mxu0 0.0
    %2264 = vmatpush1.msra.mxu0 %v312
    %2265 = vmatprep.subr.mxu0 0.0
    %2266 = vmatpush1.msra.mxu0 %v313
    %2267 = vmatprep.subr.mxu0 0.0
    %2268 = vmatpush1.msra.mxu0 %v314
    %2269 = vmatprep.subr.mxu0 0.0
    %2270 = vmatpush1.msra.mxu0 %v315
    %2271 = vmatprep.subr.mxu0 0.0
    %2272 = vmatpush1.msra.mxu0 0.0
    %2273 = vmatprep.subr.mxu0 0.0
    %2274 = vmatpush1.msra.mxu0 0.0
    %2275 = vmatprep.subr.mxu0 0.0
    %2276 = vmatpush1.msra.mxu0 0.0
    %2277 = vmatprep.subr.mxu0 0.0
    %2278 = vmatpush1.msra.mxu0 0.0
    %2279 = vmatprep.subr.mxu0 0.0
    %2280 = vmatpush1.msra.mxu0 0.0
    %2281 = vmatprep.subr.mxu0 0.0
    %2282 = vmatpush1.msra.mxu0 0.0
    %2283 = vmatprep.subr.mxu0 0.0
    %2284 = vmatpush1.msra.mxu0 0.0
    %2285 = vmatprep.subr.mxu0 0.0
    %2286 = vmatpush1.msra.mxu0 0.0
    %2287 = vmatprep.subr.mxu0 0.0
    %2288 = vmatpush1.msra.mxu0 0.0
    %2289 = vmatprep.subr.mxu0 0.0
    %2290 = vmatpush1.msra.mxu0 0.0
    %2291 = vmatprep.subr.mxu0 0.0
    %2292 = vmatpush1.msra.mxu0 0.0
    %2293 = vmatprep.subr.mxu0 0.0
    %2294 = vmatpush1.msra.mxu0 0.0
    %2295 = vmatprep.subr.mxu0 0.0
    %2296 = vmatpush1.msra.mxu0 0.0
    %2297 = vmatprep.subr.mxu0 0.0
    %2298 = vmatpush1.msra.mxu0 0.0
    %2299 = vmatprep.subr.mxu0 0.0
    %2300 = vmatpush1.msra.mxu0 0.0
    %2301 = vmatprep.subr.mxu0 0.0
    %2302 = vmatpush1.msra.mxu0 0.0
    %2303 = vmatprep.subr.mxu0 0.0
    %2304 = vmatpush1.msra.mxu0 0.0
    %2305 = vmatprep.subr.mxu0 0.0
    %2306 = vmatpush1.msra.mxu0 0.0
    %2307 = vmatprep.subr.mxu0 0.0
    %2308 = vmatpush1.msra.mxu0 0.0
    %2309 = vmatprep.subr.mxu0 0.0
    %2310 = vmatpush1.msra.mxu0 0.0
    %2311 = vmatprep.subr.mxu0 0.0
    %2312 = vmatpush1.msra.mxu0 0.0
    %2313 = vmatprep.subr.mxu0 0.0
    %2314 = vmatpush1.msra.mxu0 0.0
    %2315 = vmatprep.subr.mxu0 0.0
    %2316 = vmatpush1.msra.mxu0 0.0
    %2317 = vmatprep.subr.mxu0 0.0
    %2318 = vmatpush1.msra.mxu0 0.0
    %2319 = vmatprep.subr.mxu0 0.0
    %2320 = vmatpush1.msra.mxu0 0.0
    %2321 = vmatprep.subr.mxu0 0.0
    %2322 = vmatpush1.msra.mxu0 0.0
    %2323 = vmatprep.subr.mxu0 0.0
    %2324 = vmatpush1.msra.mxu0 0.0
    %2325 = vmatprep.subr.mxu0 0.0
    %2326 = vmatpush1.msra.mxu0 0.0
    %2327 = vmatprep.mubr.f32.mxu0 0.0
    %v2328 = vand.u32 %v1633, 4294901760
    %v2329 = vsub.f32 %v1633, %v2328
    %v2330 = vand.u32 %v2329, 4294901760
    %2331 = vmatmul.mubr.f32.gmra.mrb[0].mxu0 %v2330
    %v2332 = vpop.f32.mrb[0].mxu0
    %v2333 = vadd.f32 %v2155, %v2332
    %v2334 = vpop.f32.mrb[0].mxu0
    %2335 = vmatprep.mubr.f32.mxu0 0.0
    %v2336 = vand.u32 %v1636, 4294901760
    %v2337 = vsub.f32 %v1636, %v2336
    %v2338 = vand.u32 %v2337, 4294901760
    %2339 = vmatmul.mubr.f32.gmra.mrb[0].mxu0 %v2338
    %v2340 = vpop.f32.mrb[0].mxu0
    %v2341 = vadd.f32 %v2162, %v2340
    %v2342 = vpop.f32.mrb[0].mxu0
    %2343 = vmatprep.mubr.f32.mxu0 0.0
    %v2344 = vand.u32 %v1639, 4294901760
    %v2345 = vsub.f32 %v1639, %v2344
    %v2346 = vand.u32 %v2345, 4294901760
    %2347 = vmatmul.mubr.f32.gmra.mrb[0].mxu0 %v2346
    %v2348 = vpop.f32.mrb[0].mxu0
    %v2349 = vadd.f32 %v2169, %v2348
    %v2350 = vpop.f32.mrb[0].mxu0
    %2351 = vmatprep.mubr.f32.mxu0 0.0
    %v2352 = vand.u32 %v1642, 4294901760
    %v2353 = vsub.f32 %v1642, %v2352
    %v2354 = vand.u32 %v2353, 4294901760
    %2355 = vmatmul.mubr.f32.gmra.mrb[0].mxu0 %v2354
    %v2356 = vpop.f32.mrb[0].mxu0
    %v2357 = vadd.f32 %v2176, %v2356
    %v2358 = vpop.f32.mrb[0].mxu0
    %2359 = vmatprep.mubr.f32.mxu0 0.0
    %v2360 = vand.u32 %v1645, 4294901760
    %v2361 = vsub.f32 %v1645, %v2360
    %v2362 = vand.u32 %v2361, 4294901760
    %2363 = vmatmul.mubr.f32.gmra.mrb[0].mxu0 %v2362
    %v2364 = vpop.f32.mrb[0].mxu0
    %v2365 = vadd.f32 %v2183, %v2364
    %v2366 = vpop.f32.mrb[0].mxu0
    %2367 = vmatprep.mubr.f32.mxu0 0.0
    %v2368 = vand.u32 %v1648, 4294901760
    %v2369 = vsub.f32 %v1648, %v2368
    %v2370 = vand.u32 %v2369, 4294901760
    %2371 = vmatmul.mubr.f32.gmra.mrb[0].mxu0 %v2370
    %v2372 = vpop.f32.mrb[0].mxu0
    %v2373 = vadd.f32 %v2190, %v2372
    %v2374 = vpop.f32.mrb[0].mxu0
    %2375 = vmatprep.mubr.f32.mxu0 0.0
    %v2376 = vand.u32 %v1651, 4294901760
    %v2377 = vsub.f32 %v1651, %v2376
    %v2378 = vand.u32 %v2377, 4294901760
    %2379 = vmatmul.mubr.f32.gmra.mrb[0].mxu0 %v2378
    %v2380 = vpop.f32.mrb[0].mxu0
    %v2381 = vadd.f32 %v2197, %v2380
    %v2382 = vpop.f32.mrb[0].mxu0
    %2383 = vmatprep.mubr.f32.mxu0 0.0
    %v2384 = vand.u32 %v1654, 4294901760
    %v2385 = vsub.f32 %v1654, %v2384
    %v2386 = vand.u32 %v2385, 4294901760
    %2387 = vmatmul.mubr.f32.gmra.mrb[0].mxu0 %v2386
    %v2388 = vpop.f32.mrb[0].mxu0
    %v2389 = vadd.f32 %v2204, %v2388
    %v2390 = vpop.f32.mrb[0].mxu0
    %2391 = vmatprep.mubr.f32.mxu0 0.0
    %v2392 = vand.u32 %v1657, 4294901760
    %v2393 = vsub.f32 %v1657, %v2392
    %v2394 = vand.u32 %v2393, 4294901760
    %2395 = vmatmul.mubr.f32.gmra.mrb[0].mxu0 %v2394
    %v2396 = vpop.f32.mrb[0].mxu0
    %v2397 = vadd.f32 %v2211, %v2396
    %v2398 = vpop.f32.mrb[0].mxu0
    %2399 = vmatprep.mubr.f32.mxu0 0.0
    %v2400 = vand.u32 %v1660, 4294901760
    %v2401 = vsub.f32 %v1660, %v2400
    %v2402 = vand.u32 %v2401, 4294901760
    %2403 = vmatmul.mubr.f32.gmra.mrb[0].mxu0 %v2402
    %v2404 = vpop.f32.mrb[0].mxu0
    %v2405 = vadd.f32 %v2218, %v2404
    %v2406 = vpop.f32.mrb[0].mxu0
    %2407 = vmatprep.mubr.f32.mxu0 0.0
    %v2408 = vand.u32 %v1663, 4294901760
    %v2409 = vsub.f32 %v1663, %v2408
    %v2410 = vand.u32 %v2409, 4294901760
    %2411 = vmatmul.mubr.f32.gmra.mrb[0].mxu0 %v2410
    %v2412 = vpop.f32.mrb[0].mxu0
    %v2413 = vadd.f32 %v2225, %v2412
    %v2414 = vpop.f32.mrb[0].mxu0
    %2415 = vmatprep.mubr.f32.mxu0 0.0
    %v2416 = vand.u32 %v1666, 4294901760
    %v2417 = vsub.f32 %v1666, %v2416
    %v2418 = vand.u32 %v2417, 4294901760
    %2419 = vmatmul.mubr.f32.gmra.mrb[0].mxu0 %v2418
    %v2420 = vpop.f32.mrb[0].mxu0
    %v2421 = vadd.f32 %v2232, %v2420
    %v2422 = vpop.f32.mrb[0].mxu0
    %2423 = vmatprep.mubr.f32.mxu0 0.0
    %v2424 = vand.u32 %v1669, 4294901760
    %v2425 = vsub.f32 %v1669, %v2424
    %v2426 = vand.u32 %v2425, 4294901760
    %2427 = vmatmul.mubr.f32.gmra.mrb[0].mxu0 %v2426
    %v2428 = vpop.f32.mrb[0].mxu0
    %v2429 = vadd.f32 %v2239, %v2428
    %v2430 = vpop.f32.mrb[0].mxu0
    %2431 = vmatprep.mubr.f32.mxu0 0.0
    %v2432 = vand.u32 %v1672, 4294901760
    %v2433 = vsub.f32 %v1672, %v2432
    %v2434 = vand.u32 %v2433, 4294901760
    %2435 = vmatmul.mubr.f32.gmra.mrb[0].mxu0 %v2434
    %v2436 = vpop.f32.mrb[0].mxu0
    %v2437 = vadd.f32 %v2246, %v2436
    %v2438 = vpop.f32.mrb[0].mxu0
    %2439 = vmatprep.mubr.f32.mxu0 0.0
    %v2440 = vand.u32 %v1675, 4294901760
    %v2441 = vsub.f32 %v1675, %v2440
    %v2442 = vand.u32 %v2441, 4294901760
    %2443 = vmatmul.mubr.f32.gmra.mrb[0].mxu0 %v2442
    %v2444 = vpop.f32.mrb[0].mxu0
    %v2445 = vadd.f32 %v2253, %v2444
    %v2446 = vpop.f32.mrb[0].mxu0
    %2447 = vmatprep.mubr.f32.mxu0 0.0
    %v2448 = vand.u32 %v1678, 4294901760
    %v2449 = vsub.f32 %v1678, %v2448
    %v2450 = vand.u32 %v2449, 4294901760
    %2451 = vmatmul.mubr.f32.gmra.mrb[0].mxu0 %v2450
    %v2452 = vpop.f32.mrb[0].mxu0
    %v2453 = vadd.f32 %v2260, %v2452
    %v2454 = vpop.f32.mrb[0].mxu0
    %2455 = vdwg.mxu0
    %2456 = vmatprep.subr.mxu0 0.0
    %v2457 = vsub.f32 %v312, %v312
    %v2458 = vand.u32 %v2457, 4294901760
    %2459 = vmatpush1.msra.mxu0 %v2458
    %2460 = vmatprep.subr.mxu0 0.0
    %v2461 = vsub.f32 %v313, %v313
    %v2462 = vand.u32 %v2461, 4294901760
    %2463 = vmatpush1.msra.mxu0 %v2462
    %2464 = vmatprep.subr.mxu0 0.0
    %v2465 = vsub.f32 %v314, %v314
    %v2466 = vand.u32 %v2465, 4294901760
    %2467 = vmatpush1.msra.mxu0 %v2466
    %2468 = vmatprep.subr.mxu0 0.0
    %v2469 = vsub.f32 %v315, %v315
    %v2470 = vand.u32 %v2469, 4294901760
    %2471 = vmatpush1.msra.mxu0 %v2470
    %2472 = vmatprep.subr.mxu0 0.0
    %2473 = vmatpush1.msra.mxu0 0.0
    %2474 = vmatprep.subr.mxu0 0.0
    %2475 = vmatpush1.msra.mxu0 0.0
    %2476 = vmatprep.subr.mxu0 0.0
    %2477 = vmatpush1.msra.mxu0 0.0
    %2478 = vmatprep.subr.mxu0 0.0
    %2479 = vmatpush1.msra.mxu0 0.0
    %2480 = vmatprep.subr.mxu0 0.0
    %2481 = vmatpush1.msra.mxu0 0.0
    %2482 = vmatprep.subr.mxu0 0.0
    %2483 = vmatpush1.msra.mxu0 0.0
    %2484 = vmatprep.subr.mxu0 0.0
    %2485 = vmatpush1.msra.mxu0 0.0
    %2486 = vmatprep.subr.mxu0 0.0
    %2487 = vmatpush1.msra.mxu0 0.0
    %2488 = vmatprep.subr.mxu0 0.0
    %2489 = vmatpush1.msra.mxu0 0.0
    %2490 = vmatprep.subr.mxu0 0.0
    %2491 = vmatpush1.msra.mxu0 0.0
    %2492 = vmatprep.subr.mxu0 0.0
    %2493 = vmatpush1.msra.mxu0 0.0
    %2494 = vmatprep.subr.mxu0 0.0
    %2495 = vmatpush1.msra.mxu0 0.0
    %2496 = vmatprep.subr.mxu0 0.0
    %2497 = vmatpush1.msra.mxu0 0.0
    %2498 = vmatprep.subr.mxu0 0.0
    %2499 = vmatpush1.msra.mxu0 0.0
    %2500 = vmatprep.subr.mxu0 0.0
    %2501 = vmatpush1.msra.mxu0 0.0
    %2502 = vmatprep.subr.mxu0 0.0
    %2503 = vmatpush1.msra.mxu0 0.0
    %2504 = vmatprep.subr.mxu0 0.0
    %2505 = vmatpush1.msra.mxu0 0.0
    %2506 = vmatprep.subr.mxu0 0.0
    %2507 = vmatpush1.msra.mxu0 0.0
    %2508 = vmatprep.subr.mxu0 0.0
    %2509 = vmatpush1.msra.mxu0 0.0
    %2510 = vmatprep.subr.mxu0 0.0
    %2511 = vmatpush1.msra.mxu0 0.0
    %2512 = vmatprep.subr.mxu0 0.0
    %2513 = vmatpush1.msra.mxu0 0.0
    %2514 = vmatprep.subr.mxu0 0.0
    %2515 = vmatpush1.msra.mxu0 0.0
    %2516 = vmatprep.subr.mxu0 0.0
    %2517 = vmatpush1.msra.mxu0 0.0
    %2518 = vmatprep.subr.mxu0 0.0
    %2519 = vmatpush1.msra.mxu0 0.0
    %2520 = vmatprep.subr.mxu0 0.0
    %2521 = vmatpush1.msra.mxu0 0.0
    %2522 = vmatprep.subr.mxu0 0.0
    %2523 = vmatpush1.msra.mxu0 0.0
    %2524 = vmatprep.subr.mxu0 0.0
    %2525 = vmatpush1.msra.mxu0 0.0
    %2526 = vmatprep.subr.mxu0 0.0
    %2527 = vmatpush1.msra.mxu0 0.0
    %2528 = vmatprep.mubr.f32.mxu0 0.0
    %v2529 = vand.u32 %v1633, 4294901760
    %2530 = vmatmul.mubr.f32.gmra.mrb[0].mxu0 %v2529
    %v2531 = vpop.f32.mrb[0].mxu0
    %v2532 = vadd.f32 %v2333, %v2531
    %v2533 = vpop.f32.mrb[0].mxu0
    %2534 = vmatprep.mubr.f32.mxu0 0.0
    %v2535 = vand.u32 %v1636, 4294901760
    %2536 = vmatmul.mubr.f32.gmra.mrb[0].mxu0 %v2535
    %v2537 = vpop.f32.mrb[0].mxu0
    %v2538 = vadd.f32 %v2341, %v2537
    %v2539 = vpop.f32.mrb[0].mxu0
    %2540 = vmatprep.mubr.f32.mxu0 0.0
    %v2541 = vand.u32 %v1639, 4294901760
    %2542 = vmatmul.mubr.f32.gmra.mrb[0].mxu0 %v2541
    %v2543 = vpop.f32.mrb[0].mxu0
    %v2544 = vadd.f32 %v2349, %v2543
    %v2545 = vpop.f32.mrb[0].mxu0
    %2546 = vmatprep.mubr.f32.mxu0 0.0
    %v2547 = vand.u32 %v1642, 4294901760
    %2548 = vmatmul.mubr.f32.gmra.mrb[0].mxu0 %v2547
    %v2549 = vpop.f32.mrb[0].mxu0
    %v2550 = vadd.f32 %v2357, %v2549
    %v2551 = vpop.f32.mrb[0].mxu0
    %2552 = vmatprep.mubr.f32.mxu0 0.0
    %v2553 = vand.u32 %v1645, 4294901760
    %2554 = vmatmul.mubr.f32.gmra.mrb[0].mxu0 %v2553
    %v2555 = vpop.f32.mrb[0].mxu0
    %v2556 = vadd.f32 %v2365, %v2555
    %v2557 = vpop.f32.mrb[0].mxu0
    %2558 = vmatprep.mubr.f32.mxu0 0.0
    %v2559 = vand.u32 %v1648, 4294901760
    %2560 = vmatmul.mubr.f32.gmra.mrb[0].mxu0 %v2559
    %v2561 = vpop.f32.mrb[0].mxu0
    %v2562 = vadd.f32 %v2373, %v2561
    %v2563 = vpop.f32.mrb[0].mxu0
    %2564 = vmatprep.mubr.f32.mxu0 0.0
    %v2565 = vand.u32 %v1651, 4294901760
    %2566 = vmatmul.mubr.f32.gmra.mrb[0].mxu0 %v2565
    %v2567 = vpop.f32.mrb[0].mxu0
    %v2568 = vadd.f32 %v2381, %v2567
    %v2569 = vpop.f32.mrb[0].mxu0
    %2570 = vmatprep.mubr.f32.mxu0 0.0
    %v2571 = vand.u32 %v1654, 4294901760
    %2572 = vmatmul.mubr.f32.gmra.mrb[0].mxu0 %v2571
    %v2573 = vpop.f32.mrb[0].mxu0
    %v2574 = vadd.f32 %v2389, %v2573
    %v2575 = vpop.f32.mrb[0].mxu0
    %2576 = vmatprep.mubr.f32.mxu0 0.0
    %v2577 = vand.u32 %v1657, 4294901760
    %2578 = vmatmul.mubr.f32.gmra.mrb[0].mxu0 %v2577
    %v2579 = vpop.f32.mrb[0].mxu0
    %v2580 = vadd.f32 %v2397, %v2579
    %v2581 = vpop.f32.mrb[0].mxu0
    %2582 = vmatprep.mubr.f32.mxu0 0.0
    %v2583 = vand.u32 %v1660, 4294901760
    %2584 = vmatmul.mubr.f32.gmra.mrb[0].mxu0 %v2583
    %v2585 = vpop.f32.mrb[0].mxu0
    %v2586 = vadd.f32 %v2405, %v2585
    %v2587 = vpop.f32.mrb[0].mxu0
    %2588 = vmatprep.mubr.f32.mxu0 0.0
    %v2589 = vand.u32 %v1663, 4294901760
    %2590 = vmatmul.mubr.f32.gmra.mrb[0].mxu0 %v2589
    %v2591 = vpop.f32.mrb[0].mxu0
    %v2592 = vadd.f32 %v2413, %v2591
    %v2593 = vpop.f32.mrb[0].mxu0
    %2594 = vmatprep.mubr.f32.mxu0 0.0
    %v2595 = vand.u32 %v1666, 4294901760
    %2596 = vmatmul.mubr.f32.gmra.mrb[0].mxu0 %v2595
    %v2597 = vpop.f32.mrb[0].mxu0
    %v2598 = vadd.f32 %v2421, %v2597
    %v2599 = vpop.f32.mrb[0].mxu0
    %2600 = vmatprep.mubr.f32.mxu0 0.0
    %v2601 = vand.u32 %v1669, 4294901760
    %2602 = vmatmul.mubr.f32.gmra.mrb[0].mxu0 %v2601
    %v2603 = vpop.f32.mrb[0].mxu0
    %v2604 = vadd.f32 %v2429, %v2603
    %v2605 = vpop.f32.mrb[0].mxu0
    %2606 = vmatprep.mubr.f32.mxu0 0.0
    %v2607 = vand.u32 %v1672, 4294901760
    %2608 = vmatmul.mubr.f32.gmra.mrb[0].mxu0 %v2607
    %v2609 = vpop.f32.mrb[0].mxu0
    %v2610 = vadd.f32 %v2437, %v2609
    %v2611 = vpop.f32.mrb[0].mxu0
    %2612 = vmatprep.mubr.f32.mxu0 0.0
    %v2613 = vand.u32 %v1675, 4294901760
    %2614 = vmatmul.mubr.f32.gmra.mrb[0].mxu0 %v2613
    %v2615 = vpop.f32.mrb[0].mxu0
    %v2616 = vadd.f32 %v2445, %v2615
    %v2617 = vpop.f32.mrb[0].mxu0
    %2618 = vmatprep.mubr.f32.mxu0 0.0
    %v2619 = vand.u32 %v1678, 4294901760
    %2620 = vmatmul.mubr.f32.gmra.mrb[0].mxu0 %v2619
    %v2621 = vpop.f32.mrb[0].mxu0
    %v2622 = vadd.f32 %v2453, %v2621
    %v2623 = vpop.f32.mrb[0].mxu0
    %2624 = vdwg.mxu0
    %2625 = vmatprep.subr.mxu0 0.0
    %2626 = vmatpush1.msra.mxu0 %v312
    %2627 = vmatprep.subr.mxu0 0.0
    %2628 = vmatpush1.msra.mxu0 %v313
    %2629 = vmatprep.subr.mxu0 0.0
    %2630 = vmatpush1.msra.mxu0 %v314
    %2631 = vmatprep.subr.mxu0 0.0
    %2632 = vmatpush1.msra.mxu0 %v315
    %2633 = vmatprep.subr.mxu0 0.0
    %2634 = vmatpush1.msra.mxu0 0.0
    %2635 = vmatprep.subr.mxu0 0.0
    %2636 = vmatpush1.msra.mxu0 0.0
    %2637 = vmatprep.subr.mxu0 0.0
    %2638 = vmatpush1.msra.mxu0 0.0
    %2639 = vmatprep.subr.mxu0 0.0
    %2640 = vmatpush1.msra.mxu0 0.0
    %2641 = vmatprep.subr.mxu0 0.0
    %2642 = vmatpush1.msra.mxu0 0.0
    %2643 = vmatprep.subr.mxu0 0.0
    %2644 = vmatpush1.msra.mxu0 0.0
    %2645 = vmatprep.subr.mxu0 0.0
    %2646 = vmatpush1.msra.mxu0 0.0
    %2647 = vmatprep.subr.mxu0 0.0
    %2648 = vmatpush1.msra.mxu0 0.0
    %2649 = vmatprep.subr.mxu0 0.0
    %2650 = vmatpush1.msra.mxu0 0.0
    %2651 = vmatprep.subr.mxu0 0.0
    %2652 = vmatpush1.msra.mxu0 0.0
    %2653 = vmatprep.subr.mxu0 0.0
    %2654 = vmatpush1.msra.mxu0 0.0
    %2655 = vmatprep.subr.mxu0 0.0
    %2656 = vmatpush1.msra.mxu0 0.0
    %2657 = vmatprep.subr.mxu0 0.0
    %2658 = vmatpush1.msra.mxu0 0.0
    %2659 = vmatprep.subr.mxu0 0.0
    %2660 = vmatpush1.msra.mxu0 0.0
    %2661 = vmatprep.subr.mxu0 0.0
    %2662 = vmatpush1.msra.mxu0 0.0
    %2663 = vmatprep.subr.mxu0 0.0
    %2664 = vmatpush1.msra.mxu0 0.0
    %2665 = vmatprep.subr.mxu0 0.0
    %2666 = vmatpush1.msra.mxu0 0.0
    %2667 = vmatprep.subr.mxu0 0.0
    %2668 = vmatpush1.msra.mxu0 0.0
    %2669 = vmatprep.subr.mxu0 0.0
    %2670 = vmatpush1.msra.mxu0 0.0
    %2671 = vmatprep.subr.mxu0 0.0
    %2672 = vmatpush1.msra.mxu0 0.0
    %2673 = vmatprep.subr.mxu0 0.0
    %2674 = vmatpush1.msra.mxu0 0.0
    %2675 = vmatprep.subr.mxu0 0.0
    %2676 = vmatpush1.msra.mxu0 0.0
    %2677 = vmatprep.subr.mxu0 0.0
    %2678 = vmatpush1.msra.mxu0 0.0
    %2679 = vmatprep.subr.mxu0 0.0
    %2680 = vmatpush1.msra.mxu0 0.0
    %2681 = vmatprep.subr.mxu0 0.0
    %2682 = vmatpush1.msra.mxu0 0.0
    %2683 = vmatprep.subr.mxu0 0.0
    %2684 = vmatpush1.msra.mxu0 0.0
    %2685 = vmatprep.subr.mxu0 0.0
    %2686 = vmatpush1.msra.mxu0 0.0
    %2687 = vmatprep.subr.mxu0 0.0
    %2688 = vmatpush1.msra.mxu0 0.0
    %2689 = vmatprep.mubr.f32.mxu0 0.0
    %v2690 = vand.u32 %v1633, 4294901760
    %2691 = vmatmul.mubr.f32.gmra.mrb[0].mxu0 %v2690
    %v2692 = vpop.f32.mrb[0].mxu0
    %v2693 = vadd.f32 %v2532, %v2692
    %v2694 = vpop.f32.mrb[0].mxu0
    %2695 = vmatprep.mubr.f32.mxu0 0.0
    %v2696 = vand.u32 %v1636, 4294901760
    %2697 = vmatmul.mubr.f32.gmra.mrb[0].mxu0 %v2696
    %v2698 = vpop.f32.mrb[0].mxu0
    %v2699 = vadd.f32 %v2538, %v2698
    %v2700 = vpop.f32.mrb[0].mxu0
    %2701 = vmatprep.mubr.f32.mxu0 0.0
    %v2702 = vand.u32 %v1639, 4294901760
    %2703 = vmatmul.mubr.f32.gmra.mrb[0].mxu0 %v2702
    %v2704 = vpop.f32.mrb[0].mxu0
    %v2705 = vadd.f32 %v2544, %v2704
    %v2706 = vpop.f32.mrb[0].mxu0
    %2707 = vmatprep.mubr.f32.mxu0 0.0
    %v2708 = vand.u32 %v1642, 4294901760
    %2709 = vmatmul.mubr.f32.gmra.mrb[0].mxu0 %v2708
    %v2710 = vpop.f32.mrb[0].mxu0
    %v2711 = vadd.f32 %v2550, %v2710
    %v2712 = vpop.f32.mrb[0].mxu0
    %2713 = vmatprep.mubr.f32.mxu0 0.0
    %v2714 = vand.u32 %v1645, 4294901760
    %2715 = vmatmul.mubr.f32.gmra.mrb[0].mxu0 %v2714
    %v2716 = vpop.f32.mrb[0].mxu0
    %v2717 = vadd.f32 %v2556, %v2716
    %v2718 = vpop.f32.mrb[0].mxu0
    %2719 = vmatprep.mubr.f32.mxu0 0.0
    %v2720 = vand.u32 %v1648, 4294901760
    %2721 = vmatmul.mubr.f32.gmra.mrb[0].mxu0 %v2720
    %v2722 = vpop.f32.mrb[0].mxu0
    %v2723 = vadd.f32 %v2562, %v2722
    %v2724 = vpop.f32.mrb[0].mxu0
    %2725 = vmatprep.mubr.f32.mxu0 0.0
    %v2726 = vand.u32 %v1651, 4294901760
    %2727 = vmatmul.mubr.f32.gmra.mrb[0].mxu0 %v2726
    %v2728 = vpop.f32.mrb[0].mxu0
    %v2729 = vadd.f32 %v2568, %v2728
    %v2730 = vpop.f32.mrb[0].mxu0
    %2731 = vmatprep.mubr.f32.mxu0 0.0
    %v2732 = vand.u32 %v1654, 4294901760
    %2733 = vmatmul.mubr.f32.gmra.mrb[0].mxu0 %v2732
    %v2734 = vpop.f32.mrb[0].mxu0
    %v2735 = vadd.f32 %v2574, %v2734
    %v2736 = vpop.f32.mrb[0].mxu0
    %2737 = vmatprep.mubr.f32.mxu0 0.0
    %v2738 = vand.u32 %v1657, 4294901760
    %2739 = vmatmul.mubr.f32.gmra.mrb[0].mxu0 %v2738
    %v2740 = vpop.f32.mrb[0].mxu0
    %v2741 = vadd.f32 %v2580, %v2740
    %v2742 = vpop.f32.mrb[0].mxu0
    %2743 = vmatprep.mubr.f32.mxu0 0.0
    %v2744 = vand.u32 %v1660, 4294901760
    %2745 = vmatmul.mubr.f32.gmra.mrb[0].mxu0 %v2744
    %v2746 = vpop.f32.mrb[0].mxu0
    %v2747 = vadd.f32 %v2586, %v2746
    %v2748 = vpop.f32.mrb[0].mxu0
    %2749 = vmatprep.mubr.f32.mxu0 0.0
    %v2750 = vand.u32 %v1663, 4294901760
    %2751 = vmatmul.mubr.f32.gmra.mrb[0].mxu0 %v2750
    %v2752 = vpop.f32.mrb[0].mxu0
    %v2753 = vadd.f32 %v2592, %v2752
    %v2754 = vpop.f32.mrb[0].mxu0
    %2755 = vmatprep.mubr.f32.mxu0 0.0
    %v2756 = vand.u32 %v1666, 4294901760
    %2757 = vmatmul.mubr.f32.gmra.mrb[0].mxu0 %v2756
    %v2758 = vpop.f32.mrb[0].mxu0
    %v2759 = vadd.f32 %v2598, %v2758
    %v2760 = vpop.f32.mrb[0].mxu0
    %2761 = vmatprep.mubr.f32.mxu0 0.0
    %v2762 = vand.u32 %v1669, 4294901760
    %2763 = vmatmul.mubr.f32.gmra.mrb[0].mxu0 %v2762
    %v2764 = vpop.f32.mrb[0].mxu0
    %v2765 = vadd.f32 %v2604, %v2764
    %v2766 = vpop.f32.mrb[0].mxu0
    %2767 = vmatprep.mubr.f32.mxu0 0.0
    %v2768 = vand.u32 %v1672, 4294901760
    %2769 = vmatmul.mubr.f32.gmra.mrb[0].mxu0 %v2768
    %v2770 = vpop.f32.mrb[0].mxu0
    %v2771 = vadd.f32 %v2610, %v2770
    %v2772 = vpop.f32.mrb[0].mxu0
    %2773 = vmatprep.mubr.f32.mxu0 0.0
    %v2774 = vand.u32 %v1675, 4294901760
    %2775 = vmatmul.mubr.f32.gmra.mrb[0].mxu0 %v2774
    %v2776 = vpop.f32.mrb[0].mxu0
    %v2777 = vadd.f32 %v2616, %v2776
    %v2778 = vpop.f32.mrb[0].mxu0
    %2779 = vmatprep.mubr.f32.mxu0 0.0
    %v2780 = vand.u32 %v1678, 4294901760
    %2781 = vmatmul.mubr.f32.gmra.mrb[0].mxu0 %v2780
    %v2782 = vpop.f32.mrb[0].mxu0
    %v2783 = vadd.f32 %v2622, %v2782
    %v2784 = vpop.f32.mrb[0].mxu0
    %2785 = vdwg.mxu0
    %2786 = vst.msk [vmem:[#allocation10] sm:$0xff] %vm477, %v1539
    %2787 = vst.msk [vmem:[#allocation10 + $0x8] sm:$0xff] %vm477, %v1545
    %2788 = vst.msk [vmem:[#allocation10 + $0x10] sm:$0xff] %vm477, %v1551
    %2789 = vst.msk [vmem:[#allocation10 + $0x18] sm:$0xff] %vm477, %v1557
    %2790 = vst.msk [vmem:[#allocation10 + $0x20] sm:$0xff] %vm477, %v1563
    %2791 = vst.msk [vmem:[#allocation10 + $0x28] sm:$0xff] %vm477, %v1569
    %2792 = vst.msk [vmem:[#allocation10 + $0x30] sm:$0xff] %vm477, %v1575
    %2793 = vst.msk [vmem:[#allocation10 + $0x38] sm:$0xff] %vm477, %v1581
    %2794 = vst.msk [vmem:[#allocation10 + $0x40] sm:$0xff] %vm477, %v1587
    %2795 = vst.msk [vmem:[#allocation10 + $0x48] sm:$0xff] %vm477, %v1593
    %2796 = vst.msk [vmem:[#allocation10 + $0x50] sm:$0xff] %vm477, %v1599
    %2797 = vst.msk [vmem:[#allocation10 + $0x58] sm:$0xff] %vm477, %v1605
    %2798 = vst.msk [vmem:[#allocation10 + $0x60] sm:$0xff] %vm477, %v1611
    %2799 = vst.msk [vmem:[#allocation10 + $0x68] sm:$0xff] %vm477, %v1617
    %2800 = vst.msk [vmem:[#allocation10 + $0x70] sm:$0xff] %vm477, %v1623
    %2801 = vst.msk [vmem:[#allocation10 + $0x78] sm:$0xff] %vm477, %v1629
    %2818 = vrot.lane.b32.xlu0 %v2693, 32
    %v2819 = vpop.permute.xlu0 %2818
    %2820 = vrot.lane.b32.xlu0 %v2699, 32
    %v2821 = vpop.permute.xlu0 %2820
    %2822 = vrot.lane.b32.xlu0 %v2705, 32
    %v2823 = vpop.permute.xlu0 %2822
    %2824 = vrot.lane.b32.xlu0 %v2711, 32
    %v2825 = vpop.permute.xlu0 %2824
    %2826 = vrot.lane.b32.xlu0 %v2717, 32
    %v2827 = vpop.permute.xlu0 %2826
    %2828 = vrot.lane.b32.xlu0 %v2723, 32
    %v2829 = vpop.permute.xlu0 %2828
    %2830 = vrot.lane.b32.xlu0 %v2729, 32
    %v2831 = vpop.permute.xlu0 %2830
    %2832 = vrot.lane.b32.xlu0 %v2735, 32
    %v2833 = vpop.permute.xlu0 %2832
    %2834 = vrot.lane.b32.xlu0 %v2741, 32
    %v2835 = vpop.permute.xlu0 %2834
    %2836 = vrot.lane.b32.xlu0 %v2747, 32
    %v2837 = vpop.permute.xlu0 %2836
    %2838 = vrot.lane.b32.xlu0 %v2753, 32
    %v2839 = vpop.permute.xlu0 %2838
    %2840 = vrot.lane.b32.xlu0 %v2759, 32
    %v2841 = vpop.permute.xlu0 %2840
    %2842 = vrot.lane.b32.xlu0 %v2765, 32
    %v2843 = vpop.permute.xlu0 %2842
    %2844 = vrot.lane.b32.xlu0 %v2771, 32
    %v2845 = vpop.permute.xlu0 %2844
    %2846 = vrot.lane.b32.xlu0 %v2777, 32
    %v2847 = vpop.permute.xlu0 %2846
    %2848 = vrot.lane.b32.xlu0 %v2783, 32
    %v2849 = vpop.permute.xlu0 %2848
    %vm2866 = vcmask 523520
    %2867 = vst.msk [vmem:[#allocation10] sm:$0xff] %vm2866, %v2819
    %2868 = vst.msk [vmem:[#allocation10 + $0x8] sm:$0xff] %vm2866, %v2821
    %2869 = vst.msk [vmem:[#allocation10 + $0x10] sm:$0xff] %vm2866, %v2823
    %2870 = vst.msk [vmem:[#allocation10 + $0x18] sm:$0xff] %vm2866, %v2825
    %2871 = vst.msk [vmem:[#allocation10 + $0x20] sm:$0xff] %vm2866, %v2827
    %2872 = vst.msk [vmem:[#allocation10 + $0x28] sm:$0xff] %vm2866, %v2829
    %2873 = vst.msk [vmem:[#allocation10 + $0x30] sm:$0xff] %vm2866, %v2831
    %2874 = vst.msk [vmem:[#allocation10 + $0x38] sm:$0xff] %vm2866, %v2833
    %2875 = vst.msk [vmem:[#allocation10 + $0x40] sm:$0xff] %vm2866, %v2835
    %2876 = vst.msk [vmem:[#allocation10 + $0x48] sm:$0xff] %vm2866, %v2837
    %2877 = vst.msk [vmem:[#allocation10 + $0x50] sm:$0xff] %vm2866, %v2839
    %2878 = vst.msk [vmem:[#allocation10 + $0x58] sm:$0xff] %vm2866, %v2841
    %2879 = vst.msk [vmem:[#allocation10 + $0x60] sm:$0xff] %vm2866, %v2843
    %2880 = vst.msk [vmem:[#allocation10 + $0x68] sm:$0xff] %vm2866, %v2845
    %2881 = vst.msk [vmem:[#allocation10 + $0x70] sm:$0xff] %vm2866, %v2847
    %2882 = vst.msk [vmem:[#allocation10 + $0x78] sm:$0xff] %vm2866, %v2849
    // Predicated region
    $region34: #{winv_iwt.1} parent=1 // pred_check
      _
    $region35: #{winv_iwt.1} parent=1 // pred_check_branch
      %2884 = sbr.rel (0) target = $region37
    $region36: #{winv_iwt.1} parent=1 // pred_region
      %s2886 = ssub.s32 2048, 2048
      %2887 = vsyncadd [#allocation4], %s2886
      %s2888 = sshll.u32 [#allocation10], 4
      %s2889 = int_to_ptr.vmem [resolvable:$true] %s2888
      %2894 = dma.vmem_to_hbm [thread:$0]  %s2889, 2048, %s4, [#allocation4], 128, 128, 8
    $region37: #{winv_iwt.1} parent=1 // pred_fallthru
      _
    // Predicated region
    $region38: #{winv_iwt.1} parent=1 // pred_check
      _
    $region39: #{winv_iwt.1} parent=1 // pred_check_branch
      %2896 = sbr.rel (0) target = $region41
    $region40: #{winv_iwt.1} parent=1 // pred_region
      %2897 = dma.done [#allocation4], 2048
    $region41: #{winv_iwt.1} parent=1 // pred_fallthru
      _
    %2898 = vsyncpa [#allocation3], 1
    %2899 = vsyncpa [#allocation6], 1
    %2900 = vsyncpa [#allocation9], 1
    %2901 = vsyncpa [#allocation4], 1

</llo_original>
